<compile_context>
chip_gen: v5e
topology: v5e:2x2
jax: 0.10.0
libtpu: 0.0.40
codegen_flags: <defaults>
</compile_context>

<pallas_src>
import functools

import jax
import jax.numpy as jnp
from jax.experimental import pallas as pl
from jax.experimental.pallas import tpu as pltpu


_VMEM = pl.BlockSpec(memory_space=pltpu.MemorySpace.VMEM)


# ----------------------------------------------------------------------------
# Pallas kernel: fused embedding + bidirectional LSTM (packed) + classifier
# ----------------------------------------------------------------------------

def _disc_lstm_kernel(seq_ref, len_ref, emb_tbl_ref,
                      wih_f_ref, whh_f_ref, b_f_ref,
                      wih_b_ref, whh_b_ref, b_b_ref,
                      wc_f_ref, wc_b_ref, bc_ref,
                      out_ref,
                      gih_f_scr, gih_b_scr,
                      *, T, B, Hp):
    TB = seq_ref.shape[0]              # T * B (time-major flattened)
    V = emb_tbl_ref.shape[0]

    # ---- embedding lookup as a one-hot MXU matmul --------------------------
    # TODO(synk): for large vocab_size replace the one-hot gather with a
    # scalar-prefetch row gather (pl.Element index_map) to avoid the (T*B, V)
    # one-hot matrix.
    ids = seq_ref[...]                                            # (TB, 1) i32
    vocab_iota = jax.lax.broadcasted_iota(jnp.int32, (TB, V), 1)  # (TB, V)
    onehot = (vocab_iota == ids).astype(jnp.float32)
    emb = jnp.dot(onehot, emb_tbl_ref[...],
                  preferred_element_type=jnp.float32)             # (TB, E)

    # ---- hoisted input projections for both directions ---------------------
    gih_f_scr[...] = (jnp.dot(emb, wih_f_ref[...],
                              preferred_element_type=jnp.float32)
                      + b_f_ref[...])                             # (TB, 4Hp)
    gih_b_scr[...] = (jnp.dot(emb, wih_b_ref[...],
                              preferred_element_type=jnp.float32)
                      + b_b_ref[...])                             # (TB, 4Hp)

    lengths = len_ref[...]                                        # (B, 1) i32
    whh_f = whh_f_ref[...]
    whh_b = whh_b_ref[...]

    def lstm_cell(g, c):
        # PyTorch gate order: input, forget, cell, output.
        i = jax.nn.sigmoid(g[:, 0 * Hp:1 * Hp])
        f = jax.nn.sigmoid(g[:, 1 * Hp:2 * Hp])
        gg = jnp.tanh(g[:, 2 * Hp:3 * Hp])
        o = jax.nn.sigmoid(g[:, 3 * Hp:4 * Hp])
        c_new = f * c + i * gg
        h_new = o * jnp.tanh(c_new)
        return h_new, c_new

    def step(t, carry):
        h_f, c_f, h_b, c_b = carry
        # forward direction: t = 0 .. T-1, update only while t < length.
        gf = gih_f_scr[pl.ds(t * B, B), :] + jnp.dot(
            h_f, whh_f, preferred_element_type=jnp.float32)
        h_fn, c_fn = lstm_cell(gf, c_f)
        m_f = t < lengths                                         # (B, 1) bool
        h_f = jnp.where(m_f, h_fn, h_f)
        c_f = jnp.where(m_f, c_fn, c_f)
        # backward direction: t = T-1 .. 0 with the same validity mask, so the
        # state stays at its zero init until the last valid token (packed
        # semantics) and finishes on t = 0.
        tb = T - 1 - t
        gb = gih_b_scr[pl.ds(tb * B, B), :] + jnp.dot(
            h_b, whh_b, preferred_element_type=jnp.float32)
        h_bn, c_bn = lstm_cell(gb, c_b)
        m_b = tb < lengths
        h_b = jnp.where(m_b, h_bn, h_b)
        c_b = jnp.where(m_b, c_bn, c_b)
        return h_f, c_f, h_b, c_b

    z = jnp.zeros((B, Hp), jnp.float32)
    h_f, _, h_b, _ = jax.lax.fori_loop(0, T, step, (z, z, z, z), unroll=True)

    # hidden.transpose(0,1).view(-1, hidden_size) == concat([h_fwd, h_bwd], -1)
    # Dropout(0.2) is the identity in eval mode.
    # TODO(synk): training-mode stochastic dropout (pltpu.prng_*) not emitted.
    logits = (jnp.dot(h_f, wc_f_ref[...], preferred_element_type=jnp.float32)
              + jnp.dot(h_b, wc_b_ref[...], preferred_element_type=jnp.float32)
              + bc_ref[...])
    out_ref[...] = logits


# ----------------------------------------------------------------------------
# Wrapper
# ----------------------------------------------------------------------------

def discriminator_forward(params, seq, lengths):
    B, T = seq.shape
    Hp = params['whh_f'].shape[0]
    L = params['bc'].shape[-1]
    # time-major flattened token ids so each timestep is a contiguous row block
    seq_tm = jnp.transpose(seq, (1, 0)).reshape(T * B, 1).astype(jnp.int32)
    len_col = lengths.reshape(B, 1).astype(jnp.int32)
    kernel = functools.partial(_disc_lstm_kernel, T=T, B=B, Hp=Hp)
    return pl.pallas_call(
        kernel,
        out_shape=jax.ShapeDtypeStruct((B, L), jnp.float32),
        in_specs=[_VMEM] * 12,
        out_specs=_VMEM,
        scratch_shapes=[pltpu.VMEM((T * B, 4 * Hp), jnp.float32),
                        pltpu.VMEM((T * B, 4 * Hp), jnp.float32)],
    )(seq_tm, len_col, params['embed'],
      params['wih_f'], params['whh_f'], params['b_f'],
      params['wih_b'], params['whh_b'], params['b_b'],
      params['wc_f'], params['wc_b'], params['bc'])


# ----------------------------------------------------------------------------
# Deterministic synthetic parameters (PyTorch-style init, pre-transposed)
# ----------------------------------------------------------------------------

def make_discriminator_params(key, *, vocab_size, embed_size, hidden_size,
                              num_labels, feature_size):
    Hp = hidden_size // 2
    ks = jax.random.split(key, 11)

    def unif(k, shape, bound):
        return jax.random.uniform(k, shape, jnp.float32, -bound, bound)

    s = 1.0 / float(Hp) ** 0.5   # PyTorch LSTM init: U(-1/sqrt(H), 1/sqrt(H))
    embed = jax.random.normal(ks[0], (vocab_size, embed_size), jnp.float32)
    # LSTM weights stored transposed (in_dim, 4*Hp); gate order i,f,g,o;
    # the two PyTorch biases (b_ih + b_hh) are pre-summed.
    wih_f = unif(ks[1], (embed_size, 4 * Hp), s)
    whh_f = unif(ks[2], (Hp, 4 * Hp), s)
    b_f = unif(ks[3], (1, 4 * Hp), s) + unif(ks[4], (1, 4 * Hp), s)
    wih_b = unif(ks[5], (embed_size, 4 * Hp), s)
    whh_b = unif(ks[6], (Hp, 4 * Hp), s)
    b_b = unif(ks[7], (1, 4 * Hp), s) + unif(ks[8], (1, 4 * Hp), s)
    # classifier: the reference declares Linear(hidden_size + feature_size, L)
    # but its forward only feeds the (B, hidden_size) LSTM hidden state.
    # TODO(synk): use the first hidden_size rows of the weight -- equivalent to
    # zero-padding the missing visual features (the PyTorch forward as written
    # would shape-error).
    sc = 1.0 / float(hidden_size + feature_size) ** 0.5
    wc_full = unif(ks[9], (hidden_size + feature_size, num_labels), sc)
    bc = unif(ks[10], (1, num_labels), sc)
    wc_hidden = wc_full[:hidden_size, :]
    return dict(embed=embed,
                wih_f=wih_f, whh_f=whh_f, b_f=b_f,
                wih_b=wih_b, whh_b=whh_b, b_b=b_b,
                wc_f=wc_hidden[:Hp, :], wc_b=wc_hidden[Hp:, :], bc=bc)


# ----------------------------------------------------------------------------
# Pure-JAX reference (same math, no Pallas) for a correctness check
# ----------------------------------------------------------------------------

def discriminator_forward_ref(params, seq, lengths):
    B, T = seq.shape
    Hp = params['whh_f'].shape[0]
    emb = params['embed'][seq]                                  # (B, T, E)
    gih_f = emb @ params['wih_f'] + params['b_f']               # (B, T, 4Hp)
    gih_b = emb @ params['wih_b'] + params['b_b']

    def cell(g, c):
        i = jax.nn.sigmoid(g[:, 0 * Hp:1 * Hp])
        f = jax.nn.sigmoid(g[:, 1 * Hp:2 * Hp])
        gg = jnp.tanh(g[:, 2 * Hp:3 * Hp])
        o = jax.nn.sigmoid(g[:, 3 * Hp:4 * Hp])
        c_new = f * c + i * gg
        return o * jnp.tanh(c_new), c_new

    h_f = c_f = h_b = c_b = jnp.zeros((B, Hp), jnp.float32)
    lens = lengths.reshape(B, 1)
    for t in range(T):
        m = t < lens
        hn, cn = cell(gih_f[:, t, :] + h_f @ params['whh_f'], c_f)
        h_f = jnp.where(m, hn, h_f)
        c_f = jnp.where(m, cn, c_f)
        tb = T - 1 - t
        mb = tb < lens
        hn, cn = cell(gih_b[:, tb, :] + h_b @ params['whh_b'], c_b)
        h_b = jnp.where(mb, hn, h_b)
        c_b = jnp.where(mb, cn, c_b)
    return h_f @ params['wc_f'] + h_b @ params['wc_b'] + params['bc']


if __name__ == "__main__":
    key = jax.random.PRNGKey(0)
    pkey, skey = jax.random.split(key)

    vocab_size, embed_size, hidden_size = 32, 16, 32
    num_labels, feature_size = 2, 64
    B, T = 2, 8

    params = make_discriminator_params(
        pkey, vocab_size=vocab_size, embed_size=embed_size,
        hidden_size=hidden_size, num_labels=num_labels,
        feature_size=feature_size)

    seq = jax.random.randint(skey, (B, T), 0, vocab_size, dtype=jnp.int32)
    # pack_padded_sequence expects descending lengths; masking handles any >=1.
    lengths = jnp.array([8, 5], dtype=jnp.int32)

    out = discriminator_forward(params, seq, lengths)
    out = jax.block_until_ready(out)
    assert out.shape == (B, num_labels), out.shape
    assert bool(jnp.all(jnp.isfinite(out)))

    ref = discriminator_forward_ref(params, seq, lengths)
    assert jnp.allclose(out, ref, rtol=2e-3, atol=2e-3), (out, ref)

    print("KERNEL_OK")
</pallas_src>

<mosaic_0001>
module attributes {stable_mosaic.version = 11 : i64} {
  func.func @_disc_lstm_kernel(%arg0: memref<16x1xi32, #tpu.memory_space<vmem>>, %arg1: memref<2x1xi32, #tpu.memory_space<vmem>>, %arg2: memref<32x16xf32, #tpu.memory_space<vmem>>, %arg3: memref<16x64xf32, #tpu.memory_space<vmem>>, %arg4: memref<16x64xf32, #tpu.memory_space<vmem>>, %arg5: memref<1x64xf32, #tpu.memory_space<vmem>>, %arg6: memref<16x64xf32, #tpu.memory_space<vmem>>, %arg7: memref<16x64xf32, #tpu.memory_space<vmem>>, %arg8: memref<1x64xf32, #tpu.memory_space<vmem>>, %arg9: memref<16x2xf32, #tpu.memory_space<vmem>>, %arg10: memref<16x2xf32, #tpu.memory_space<vmem>>, %arg11: memref<1x2xf32, #tpu.memory_space<vmem>>, %arg12: memref<2x2xf32, #tpu.memory_space<vmem>>, %arg13: memref<16x64xf32, #tpu.memory_space<vmem>>, %arg14: memref<16x64xf32, #tpu.memory_space<vmem>>) attributes {dimension_semantics = [], scalar_prefetch = 0 : i64, scratch_operands = 2 : i64, tpu.core_type = #tpu.core_type<tc>} {
    %c0 = arith.constant 0 : index
    %c0_0 = arith.constant 0 : index
    %0 = vector.load %arg0[%c0, %c0_0] : memref<16x1xi32, #tpu.memory_space<vmem>>, vector<16x1xi32>
    %1 = tpu.iota {dimensions = array<i32: 1>} : vector<16x32xi32>
    %2 = vector.broadcast %0 : vector<16x1xi32> to vector<16x32xi32>
    %3 = arith.cmpi eq, %1, %2 : vector<16x32xi32>
    %4 = arith.extui %3 : vector<16x32xi1> to vector<16x32xi32>
    %5 = arith.sitofp %4 : vector<16x32xi32> to vector<16x32xf32>
    %c0_1 = arith.constant 0 : index
    %c0_2 = arith.constant 0 : index
    %6 = vector.load %arg2[%c0_1, %c0_2] : memref<32x16xf32, #tpu.memory_space<vmem>>, vector<32x16xf32>
    %cst = arith.constant dense<0.000000e+00> : vector<16x16xf32>
    %7 = tpu.matmul %5, %6, %cst {dimension_numbers = #tpu.dot_dimension_numbers<[1], [0], [0], [1], [0, 0, 1, 1], [], []>} : vector<16x32xf32>, vector<32x16xf32>, vector<16x16xf32> -> vector<16x16xf32>
    %c0_3 = arith.constant 0 : index
    %c0_4 = arith.constant 0 : index
    %8 = vector.load %arg3[%c0_3, %c0_4] : memref<16x64xf32, #tpu.memory_space<vmem>>, vector<16x64xf32>
    %cst_5 = arith.constant dense<0.000000e+00> : vector<16x64xf32>
    %9 = tpu.matmul %7, %8, %cst_5 {dimension_numbers = #tpu.dot_dimension_numbers<[1], [0], [0], [1], [0, 0, 1, 1], [], []>} : vector<16x16xf32>, vector<16x64xf32>, vector<16x64xf32> -> vector<16x64xf32>
    %c0_6 = arith.constant 0 : index
    %c0_7 = arith.constant 0 : index
    %10 = vector.load %arg5[%c0_6, %c0_7] : memref<1x64xf32, #tpu.memory_space<vmem>>, vector<1x64xf32>
    %11 = vector.broadcast %10 : vector<1x64xf32> to vector<16x64xf32>
    %12 = arith.addf %9, %11 : vector<16x64xf32>
    %c0_8 = arith.constant 0 : index
    %c0_9 = arith.constant 0 : index
    %13 = vector.load %arg13[%c0_8, %c0_9] : memref<16x64xf32, #tpu.memory_space<vmem>>, vector<16x64xf32>
    tpu.vector_store %arg13[%c0_8, %c0_9], %12 {strides = array<i32>} : memref<16x64xf32, #tpu.memory_space<vmem>>, vector<16x64xf32>,
    %c0_10 = arith.constant 0 : index
    %c0_11 = arith.constant 0 : index
    %14 = vector.load %arg6[%c0_10, %c0_11] : memref<16x64xf32, #tpu.memory_space<vmem>>, vector<16x64xf32>
    %cst_12 = arith.constant dense<0.000000e+00> : vector<16x64xf32>
    %15 = tpu.matmul %7, %14, %cst_12 {dimension_numbers = #tpu.dot_dimension_numbers<[1], [0], [0], [1], [0, 0, 1, 1], [], []>} : vector<16x16xf32>, vector<16x64xf32>, vector<16x64xf32> -> vector<16x64xf32>
    %c0_13 = arith.constant 0 : index
    %c0_14 = arith.constant 0 : index
    %16 = vector.load %arg8[%c0_13, %c0_14] : memref<1x64xf32, #tpu.memory_space<vmem>>, vector<1x64xf32>
    %17 = vector.broadcast %16 : vector<1x64xf32> to vector<16x64xf32>
    %18 = arith.addf %15, %17 : vector<16x64xf32>
    %c0_15 = arith.constant 0 : index
    %c0_16 = arith.constant 0 : index
    %19 = vector.load %arg14[%c0_15, %c0_16] : memref<16x64xf32, #tpu.memory_space<vmem>>, vector<16x64xf32>
    tpu.vector_store %arg14[%c0_15, %c0_16], %18 {strides = array<i32>} : memref<16x64xf32, #tpu.memory_space<vmem>>, vector<16x64xf32>,
    %c0_17 = arith.constant 0 : index
    %c0_18 = arith.constant 0 : index
    %20 = vector.load %arg1[%c0_17, %c0_18] : memref<2x1xi32, #tpu.memory_space<vmem>>, vector<2x1xi32>
    %c0_19 = arith.constant 0 : index
    %c0_20 = arith.constant 0 : index
    %21 = vector.load %arg4[%c0_19, %c0_20] : memref<16x64xf32, #tpu.memory_space<vmem>>, vector<16x64xf32>
    %c0_21 = arith.constant 0 : index
    %c0_22 = arith.constant 0 : index
    %22 = vector.load %arg7[%c0_21, %c0_22] : memref<16x64xf32, #tpu.memory_space<vmem>>, vector<16x64xf32>
    %cst_23 = arith.constant 0.000000e+00 : f32
    %23 = vector.broadcast %cst_23 : f32 to vector<2x16xf32>
    %c0_i32 = arith.constant 0 : i32
    %c2_i32 = arith.constant 2 : i32
    %24 = arith.muli %c0_i32, %c2_i32 : i32
    %25 = arith.index_cast %24 : i32 to index
    %c0_24 = arith.constant 0 : index
    %26 = vector.load %arg13[%25, %c0_24] : memref<16x64xf32, #tpu.memory_space<vmem>>, vector<2x64xf32>
    %cst_25 = arith.constant dense<0.000000e+00> : vector<2x64xf32>
    %27 = tpu.matmul %23, %21, %cst_25 {dimension_numbers = #tpu.dot_dimension_numbers<[1], [0], [0], [1], [0, 0, 1, 1], [], []>} : vector<2x16xf32>, vector<16x64xf32>, vector<2x64xf32> -> vector<2x64xf32>
    %28 = arith.addf %26, %27 : vector<2x64xf32>
    %29 = vector.extract_strided_slice %28 {offsets = [0, 0], sizes = [2, 16], strides = [1, 1]} : vector<2x64xf32> to vector<2x16xf32>
    %30 = arith.negf %29 : vector<2x16xf32>
    %31 = math.exp %30 : vector<2x16xf32>
    %cst_26 = arith.constant 1.000000e+00 : f32
    %32 = vector.broadcast %cst_26 : f32 to vector<2x16xf32>
    %33 = arith.addf %32, %31 : vector<2x16xf32>
    %34 = arith.divf %32, %33 : vector<2x16xf32>
    %35 = vector.extract_strided_slice %28 {offsets = [0, 16], sizes = [2, 16], strides = [1, 1]} : vector<2x64xf32> to vector<2x16xf32>
    %36 = arith.negf %35 : vector<2x16xf32>
    %37 = math.exp %36 : vector<2x16xf32>
    %cst_27 = arith.constant 1.000000e+00 : f32
    %38 = vector.broadcast %cst_27 : f32 to vector<2x16xf32>
    %39 = arith.addf %38, %37 : vector<2x16xf32>
    %40 = arith.divf %38, %39 : vector<2x16xf32>
    %41 = vector.extract_strided_slice %28 {offsets = [0, 32], sizes = [2, 16], strides = [1, 1]} : vector<2x64xf32> to vector<2x16xf32>
    %42 = math.tanh %41 : vector<2x16xf32>
    %43 = vector.extract_strided_slice %28 {offsets = [0, 48], sizes = [2, 16], strides = [1, 1]} : vector<2x64xf32> to vector<2x16xf32>
    %44 = arith.negf %43 : vector<2x16xf32>
    %45 = math.exp %44 : vector<2x16xf32>
    %cst_28 = arith.constant 1.000000e+00 : f32
    %46 = vector.broadcast %cst_28 : f32 to vector<2x16xf32>
    %47 = arith.addf %46, %45 : vector<2x16xf32>
    %48 = arith.divf %46, %47 : vector<2x16xf32>
    %49 = arith.mulf %40, %23 : vector<2x16xf32>
    %50 = arith.mulf %34, %42 : vector<2x16xf32>
    %51 = arith.addf %49, %50 : vector<2x16xf32>
    %52 = math.tanh %51 : vector<2x16xf32>
    %53 = arith.mulf %48, %52 : vector<2x16xf32>
    %54 = vector.broadcast %c0_i32 : i32 to vector<2x1xi32>
    %55 = arith.cmpi slt, %54, %20 : vector<2x1xi32>
    %56 = vector.shape_cast %55 : vector<2x1xi1> to vector<2x1xi1>
    %57 = vector.broadcast %56 : vector<2x1xi1> to vector<2x16xi1>
    %58 = arith.select %57, %53, %23 : vector<2x16xi1>, vector<2x16xf32>
    %59 = vector.shape_cast %55 : vector<2x1xi1> to vector<2x1xi1>
    %60 = vector.broadcast %59 : vector<2x1xi1> to vector<2x16xi1>
    %61 = arith.select %60, %51, %23 : vector<2x16xi1>, vector<2x16xf32>
    %c7_i32 = arith.constant 7 : i32
    %62 = arith.subi %c7_i32, %c0_i32 : i32
    %c2_i32_29 = arith.constant 2 : i32
    %63 = arith.muli %62, %c2_i32_29 : i32
    %64 = arith.index_cast %63 : i32 to index
    %c0_30 = arith.constant 0 : index
    %65 = vector.load %arg14[%64, %c0_30] : memref<16x64xf32, #tpu.memory_space<vmem>>, vector<2x64xf32>
    %cst_31 = arith.constant dense<0.000000e+00> : vector<2x64xf32>
    %66 = tpu.matmul %23, %22, %cst_31 {dimension_numbers = #tpu.dot_dimension_numbers<[1], [0], [0], [1], [0, 0, 1, 1], [], []>} : vector<2x16xf32>, vector<16x64xf32>, vector<2x64xf32> -> vector<2x64xf32>
    %67 = arith.addf %65, %66 : vector<2x64xf32>
    %68 = vector.extract_strided_slice %67 {offsets = [0, 0], sizes = [2, 16], strides = [1, 1]} : vector<2x64xf32> to vector<2x16xf32>
    %69 = arith.negf %68 : vector<2x16xf32>
    %70 = math.exp %69 : vector<2x16xf32>
    %cst_32 = arith.constant 1.000000e+00 : f32
    %71 = vector.broadcast %cst_32 : f32 to vector<2x16xf32>
    %72 = arith.addf %71, %70 : vector<2x16xf32>
    %73 = arith.divf %71, %72 : vector<2x16xf32>
    %74 = vector.extract_strided_slice %67 {offsets = [0, 16], sizes = [2, 16], strides = [1, 1]} : vector<2x64xf32> to vector<2x16xf32>
    %75 = arith.negf %74 : vector<2x16xf32>
    %76 = math.exp %75 : vector<2x16xf32>
    %cst_33 = arith.constant 1.000000e+00 : f32
    %77 = vector.broadcast %cst_33 : f32 to vector<2x16xf32>
    %78 = arith.addf %77, %76 : vector<2x16xf32>
    %79 = arith.divf %77, %78 : vector<2x16xf32>
    %80 = vector.extract_strided_slice %67 {offsets = [0, 32], sizes = [2, 16], strides = [1, 1]} : vector<2x64xf32> to vector<2x16xf32>
    %81 = math.tanh %80 : vector<2x16xf32>
    %82 = vector.extract_strided_slice %67 {offsets = [0, 48], sizes = [2, 16], strides = [1, 1]} : vector<2x64xf32> to vector<2x16xf32>
    %83 = arith.negf %82 : vector<2x16xf32>
    %84 = math.exp %83 : vector<2x16xf32>
    %cst_34 = arith.constant 1.000000e+00 : f32
    %85 = vector.broadcast %cst_34 : f32 to vector<2x16xf32>
    %86 = arith.addf %85, %84 : vector<2x16xf32>
    %87 = arith.divf %85, %86 : vector<2x16xf32>
    %88 = arith.mulf %79, %23 : vector<2x16xf32>
    %89 = arith.mulf %73, %81 : vector<2x16xf32>
    %90 = arith.addf %88, %89 : vector<2x16xf32>
    %91 = math.tanh %90 : vector<2x16xf32>
    %92 = arith.mulf %87, %91 : vector<2x16xf32>
    %93 = vector.broadcast %62 : i32 to vector<2x1xi32>
    %94 = arith.cmpi slt, %93, %20 : vector<2x1xi32>
    %95 = vector.shape_cast %94 : vector<2x1xi1> to vector<2x1xi1>
    %96 = vector.broadcast %95 : vector<2x1xi1> to vector<2x16xi1>
    %97 = arith.select %96, %92, %23 : vector<2x16xi1>, vector<2x16xf32>
    %98 = vector.shape_cast %94 : vector<2x1xi1> to vector<2x1xi1>
    %99 = vector.broadcast %98 : vector<2x1xi1> to vector<2x16xi1>
    %100 = arith.select %99, %90, %23 : vector<2x16xi1>, vector<2x16xf32>
    %c1_i32 = arith.constant 1 : i32
    %c2_i32_35 = arith.constant 2 : i32
    %101 = arith.muli %c1_i32, %c2_i32_35 : i32
    %102 = arith.index_cast %101 : i32 to index
    %c0_36 = arith.constant 0 : index
    %103 = vector.load %arg13[%102, %c0_36] : memref<16x64xf32, #tpu.memory_space<vmem>>, vector<2x64xf32>
    %cst_37 = arith.constant dense<0.000000e+00> : vector<2x64xf32>
    %104 = tpu.matmul %58, %21, %cst_37 {dimension_numbers = #tpu.dot_dimension_numbers<[1], [0], [0], [1], [0, 0, 1, 1], [], []>} : vector<2x16xf32>, vector<16x64xf32>, vector<2x64xf32> -> vector<2x64xf32>
    %105 = arith.addf %103, %104 : vector<2x64xf32>
    %106 = vector.extract_strided_slice %105 {offsets = [0, 0], sizes = [2, 16], strides = [1, 1]} : vector<2x64xf32> to vector<2x16xf32>
    %107 = arith.negf %106 : vector<2x16xf32>
    %108 = math.exp %107 : vector<2x16xf32>
    %cst_38 = arith.constant 1.000000e+00 : f32
    %109 = vector.broadcast %cst_38 : f32 to vector<2x16xf32>
    %110 = arith.addf %109, %108 : vector<2x16xf32>
    %111 = arith.divf %109, %110 : vector<2x16xf32>
    %112 = vector.extract_strided_slice %105 {offsets = [0, 16], sizes = [2, 16], strides = [1, 1]} : vector<2x64xf32> to vector<2x16xf32>
    %113 = arith.negf %112 : vector<2x16xf32>
    %114 = math.exp %113 : vector<2x16xf32>
    %cst_39 = arith.constant 1.000000e+00 : f32
    %115 = vector.broadcast %cst_39 : f32 to vector<2x16xf32>
    %116 = arith.addf %115, %114 : vector<2x16xf32>
    %117 = arith.divf %115, %116 : vector<2x16xf32>
    %118 = vector.extract_strided_slice %105 {offsets = [0, 32], sizes = [2, 16], strides = [1, 1]} : vector<2x64xf32> to vector<2x16xf32>
    %119 = math.tanh %118 : vector<2x16xf32>
    %120 = vector.extract_strided_slice %105 {offsets = [0, 48], sizes = [2, 16], strides = [1, 1]} : vector<2x64xf32> to vector<2x16xf32>
    %121 = arith.negf %120 : vector<2x16xf32>
    %122 = math.exp %121 : vector<2x16xf32>
    %cst_40 = arith.constant 1.000000e+00 : f32
    %123 = vector.broadcast %cst_40 : f32 to vector<2x16xf32>
    %124 = arith.addf %123, %122 : vector<2x16xf32>
    %125 = arith.divf %123, %124 : vector<2x16xf32>
    %126 = arith.mulf %117, %61 : vector<2x16xf32>
    %127 = arith.mulf %111, %119 : vector<2x16xf32>
    %128 = arith.addf %126, %127 : vector<2x16xf32>
    %129 = math.tanh %128 : vector<2x16xf32>
    %130 = arith.mulf %125, %129 : vector<2x16xf32>
    %131 = vector.broadcast %c1_i32 : i32 to vector<2x1xi32>
    %132 = arith.cmpi slt, %131, %20 : vector<2x1xi32>
    %133 = vector.shape_cast %132 : vector<2x1xi1> to vector<2x1xi1>
    %134 = vector.broadcast %133 : vector<2x1xi1> to vector<2x16xi1>
    %135 = arith.select %134, %130, %58 : vector<2x16xi1>, vector<2x16xf32>
    %136 = vector.shape_cast %132 : vector<2x1xi1> to vector<2x1xi1>
    %137 = vector.broadcast %136 : vector<2x1xi1> to vector<2x16xi1>
    %138 = arith.select %137, %128, %61 : vector<2x16xi1>, vector<2x16xf32>
    %c7_i32_41 = arith.constant 7 : i32
    %139 = arith.subi %c7_i32_41, %c1_i32 : i32
    %c2_i32_42 = arith.constant 2 : i32
    %140 = arith.muli %139, %c2_i32_42 : i32
    %141 = arith.index_cast %140 : i32 to index
    %c0_43 = arith.constant 0 : index
    %142 = vector.load %arg14[%141, %c0_43] : memref<16x64xf32, #tpu.memory_space<vmem>>, vector<2x64xf32>
    %cst_44 = arith.constant dense<0.000000e+00> : vector<2x64xf32>
    %143 = tpu.matmul %97, %22, %cst_44 {dimension_numbers = #tpu.dot_dimension_numbers<[1], [0], [0], [1], [0, 0, 1, 1], [], []>} : vector<2x16xf32>, vector<16x64xf32>, vector<2x64xf32> -> vector<2x64xf32>
    %144 = arith.addf %142, %143 : vector<2x64xf32>
    %145 = vector.extract_strided_slice %144 {offsets = [0, 0], sizes = [2, 16], strides = [1, 1]} : vector<2x64xf32> to vector<2x16xf32>
    %146 = arith.negf %145 : vector<2x16xf32>
    %147 = math.exp %146 : vector<2x16xf32>
    %cst_45 = arith.constant 1.000000e+00 : f32
    %148 = vector.broadcast %cst_45 : f32 to vector<2x16xf32>
    %149 = arith.addf %148, %147 : vector<2x16xf32>
    %150 = arith.divf %148, %149 : vector<2x16xf32>
    %151 = vector.extract_strided_slice %144 {offsets = [0, 16], sizes = [2, 16], strides = [1, 1]} : vector<2x64xf32> to vector<2x16xf32>
    %152 = arith.negf %151 : vector<2x16xf32>
    %153 = math.exp %152 : vector<2x16xf32>
    %cst_46 = arith.constant 1.000000e+00 : f32
    %154 = vector.broadcast %cst_46 : f32 to vector<2x16xf32>
    %155 = arith.addf %154, %153 : vector<2x16xf32>
    %156 = arith.divf %154, %155 : vector<2x16xf32>
    %157 = vector.extract_strided_slice %144 {offsets = [0, 32], sizes = [2, 16], strides = [1, 1]} : vector<2x64xf32> to vector<2x16xf32>
    %158 = math.tanh %157 : vector<2x16xf32>
    %159 = vector.extract_strided_slice %144 {offsets = [0, 48], sizes = [2, 16], strides = [1, 1]} : vector<2x64xf32> to vector<2x16xf32>
    %160 = arith.negf %159 : vector<2x16xf32>
    %161 = math.exp %160 : vector<2x16xf32>
    %cst_47 = arith.constant 1.000000e+00 : f32
    %162 = vector.broadcast %cst_47 : f32 to vector<2x16xf32>
    %163 = arith.addf %162, %161 : vector<2x16xf32>
    %164 = arith.divf %162, %163 : vector<2x16xf32>
    %165 = arith.mulf %156, %100 : vector<2x16xf32>
    %166 = arith.mulf %150, %158 : vector<2x16xf32>
    %167 = arith.addf %165, %166 : vector<2x16xf32>
    %168 = math.tanh %167 : vector<2x16xf32>
    %169 = arith.mulf %164, %168 : vector<2x16xf32>
    %170 = vector.broadcast %139 : i32 to vector<2x1xi32>
    %171 = arith.cmpi slt, %170, %20 : vector<2x1xi32>
    %172 = vector.shape_cast %171 : vector<2x1xi1> to vector<2x1xi1>
    %173 = vector.broadcast %172 : vector<2x1xi1> to vector<2x16xi1>
    %174 = arith.select %173, %169, %97 : vector<2x16xi1>, vector<2x16xf32>
    %175 = vector.shape_cast %171 : vector<2x1xi1> to vector<2x1xi1>
    %176 = vector.broadcast %175 : vector<2x1xi1> to vector<2x16xi1>
    %177 = arith.select %176, %167, %100 : vector<2x16xi1>, vector<2x16xf32>
    %c2_i32_48 = arith.constant 2 : i32
    %c2_i32_49 = arith.constant 2 : i32
    %178 = arith.muli %c2_i32_48, %c2_i32_49 : i32
    %179 = arith.index_cast %178 : i32 to index
    %c0_50 = arith.constant 0 : index
    %180 = vector.load %arg13[%179, %c0_50] : memref<16x64xf32, #tpu.memory_space<vmem>>, vector<2x64xf32>
    %cst_51 = arith.constant dense<0.000000e+00> : vector<2x64xf32>
    %181 = tpu.matmul %135, %21, %cst_51 {dimension_numbers = #tpu.dot_dimension_numbers<[1], [0], [0], [1], [0, 0, 1, 1], [], []>} : vector<2x16xf32>, vector<16x64xf32>, vector<2x64xf32> -> vector<2x64xf32>
    %182 = arith.addf %180, %181 : vector<2x64xf32>
    %183 = vector.extract_strided_slice %182 {offsets = [0, 0], sizes = [2, 16], strides = [1, 1]} : vector<2x64xf32> to vector<2x16xf32>
    %184 = arith.negf %183 : vector<2x16xf32>
    %185 = math.exp %184 : vector<2x16xf32>
    %cst_52 = arith.constant 1.000000e+00 : f32
    %186 = vector.broadcast %cst_52 : f32 to vector<2x16xf32>
    %187 = arith.addf %186, %185 : vector<2x16xf32>
    %188 = arith.divf %186, %187 : vector<2x16xf32>
    %189 = vector.extract_strided_slice %182 {offsets = [0, 16], sizes = [2, 16], strides = [1, 1]} : vector<2x64xf32> to vector<2x16xf32>
    %190 = arith.negf %189 : vector<2x16xf32>
    %191 = math.exp %190 : vector<2x16xf32>
    %cst_53 = arith.constant 1.000000e+00 : f32
    %192 = vector.broadcast %cst_53 : f32 to vector<2x16xf32>
    %193 = arith.addf %192, %191 : vector<2x16xf32>
    %194 = arith.divf %192, %193 : vector<2x16xf32>
    %195 = vector.extract_strided_slice %182 {offsets = [0, 32], sizes = [2, 16], strides = [1, 1]} : vector<2x64xf32> to vector<2x16xf32>
    %196 = math.tanh %195 : vector<2x16xf32>
    %197 = vector.extract_strided_slice %182 {offsets = [0, 48], sizes = [2, 16], strides = [1, 1]} : vector<2x64xf32> to vector<2x16xf32>
    %198 = arith.negf %197 : vector<2x16xf32>
    %199 = math.exp %198 : vector<2x16xf32>
    %cst_54 = arith.constant 1.000000e+00 : f32
    %200 = vector.broadcast %cst_54 : f32 to vector<2x16xf32>
    %201 = arith.addf %200, %199 : vector<2x16xf32>
    %202 = arith.divf %200, %201 : vector<2x16xf32>
    %203 = arith.mulf %194, %138 : vector<2x16xf32>
    %204 = arith.mulf %188, %196 : vector<2x16xf32>
    %205 = arith.addf %203, %204 : vector<2x16xf32>
    %206 = math.tanh %205 : vector<2x16xf32>
    %207 = arith.mulf %202, %206 : vector<2x16xf32>
    %208 = vector.broadcast %c2_i32_48 : i32 to vector<2x1xi32>
    %209 = arith.cmpi slt, %208, %20 : vector<2x1xi32>
    %210 = vector.shape_cast %209 : vector<2x1xi1> to vector<2x1xi1>
    %211 = vector.broadcast %210 : vector<2x1xi1> to vector<2x16xi1>
    %212 = arith.select %211, %207, %135 : vector<2x16xi1>, vector<2x16xf32>
    %213 = vector.shape_cast %209 : vector<2x1xi1> to vector<2x1xi1>
    %214 = vector.broadcast %213 : vector<2x1xi1> to vector<2x16xi1>
    %215 = arith.select %214, %205, %138 : vector<2x16xi1>, vector<2x16xf32>
    %c7_i32_55 = arith.constant 7 : i32
    %216 = arith.subi %c7_i32_55, %c2_i32_48 : i32
    %c2_i32_56 = arith.constant 2 : i32
    %217 = arith.muli %216, %c2_i32_56 : i32
    %218 = arith.index_cast %217 : i32 to index
    %c0_57 = arith.constant 0 : index
    %219 = vector.load %arg14[%218, %c0_57] : memref<16x64xf32, #tpu.memory_space<vmem>>, vector<2x64xf32>
    %cst_58 = arith.constant dense<0.000000e+00> : vector<2x64xf32>
    %220 = tpu.matmul %174, %22, %cst_58 {dimension_numbers = #tpu.dot_dimension_numbers<[1], [0], [0], [1], [0, 0, 1, 1], [], []>} : vector<2x16xf32>, vector<16x64xf32>, vector<2x64xf32> -> vector<2x64xf32>
    %221 = arith.addf %219, %220 : vector<2x64xf32>
    %222 = vector.extract_strided_slice %221 {offsets = [0, 0], sizes = [2, 16], strides = [1, 1]} : vector<2x64xf32> to vector<2x16xf32>
    %223 = arith.negf %222 : vector<2x16xf32>
    %224 = math.exp %223 : vector<2x16xf32>
    %cst_59 = arith.constant 1.000000e+00 : f32
    %225 = vector.broadcast %cst_59 : f32 to vector<2x16xf32>
    %226 = arith.addf %225, %224 : vector<2x16xf32>
    %227 = arith.divf %225, %226 : vector<2x16xf32>
    %228 = vector.extract_strided_slice %221 {offsets = [0, 16], sizes = [2, 16], strides = [1, 1]} : vector<2x64xf32> to vector<2x16xf32>
    %229 = arith.negf %228 : vector<2x16xf32>
    %230 = math.exp %229 : vector<2x16xf32>
    %cst_60 = arith.constant 1.000000e+00 : f32
    %231 = vector.broadcast %cst_60 : f32 to vector<2x16xf32>
    %232 = arith.addf %231, %230 : vector<2x16xf32>
    %233 = arith.divf %231, %232 : vector<2x16xf32>
    %234 = vector.extract_strided_slice %221 {offsets = [0, 32], sizes = [2, 16], strides = [1, 1]} : vector<2x64xf32> to vector<2x16xf32>
    %235 = math.tanh %234 : vector<2x16xf32>
    %236 = vector.extract_strided_slice %221 {offsets = [0, 48], sizes = [2, 16], strides = [1, 1]} : vector<2x64xf32> to vector<2x16xf32>
    %237 = arith.negf %236 : vector<2x16xf32>
    %238 = math.exp %237 : vector<2x16xf32>
    %cst_61 = arith.constant 1.000000e+00 : f32
    %239 = vector.broadcast %cst_61 : f32 to vector<2x16xf32>
    %240 = arith.addf %239, %238 : vector<2x16xf32>
    %241 = arith.divf %239, %240 : vector<2x16xf32>
    %242 = arith.mulf %233, %177 : vector<2x16xf32>
    %243 = arith.mulf %227, %235 : vector<2x16xf32>
    %244 = arith.addf %242, %243 : vector<2x16xf32>
    %245 = math.tanh %244 : vector<2x16xf32>
    %246 = arith.mulf %241, %245 : vector<2x16xf32>
    %247 = vector.broadcast %216 : i32 to vector<2x1xi32>
    %248 = arith.cmpi slt, %247, %20 : vector<2x1xi32>
    %249 = vector.shape_cast %248 : vector<2x1xi1> to vector<2x1xi1>
    %250 = vector.broadcast %249 : vector<2x1xi1> to vector<2x16xi1>
    %251 = arith.select %250, %246, %174 : vector<2x16xi1>, vector<2x16xf32>
    %252 = vector.shape_cast %248 : vector<2x1xi1> to vector<2x1xi1>
    %253 = vector.broadcast %252 : vector<2x1xi1> to vector<2x16xi1>
    %254 = arith.select %253, %244, %177 : vector<2x16xi1>, vector<2x16xf32>
    %c3_i32 = arith.constant 3 : i32
    %c2_i32_62 = arith.constant 2 : i32
    %255 = arith.muli %c3_i32, %c2_i32_62 : i32
    %256 = arith.index_cast %255 : i32 to index
    %c0_63 = arith.constant 0 : index
    %257 = vector.load %arg13[%256, %c0_63] : memref<16x64xf32, #tpu.memory_space<vmem>>, vector<2x64xf32>
    %cst_64 = arith.constant dense<0.000000e+00> : vector<2x64xf32>
    %258 = tpu.matmul %212, %21, %cst_64 {dimension_numbers = #tpu.dot_dimension_numbers<[1], [0], [0], [1], [0, 0, 1, 1], [], []>} : vector<2x16xf32>, vector<16x64xf32>, vector<2x64xf32> -> vector<2x64xf32>
    %259 = arith.addf %257, %258 : vector<2x64xf32>
    %260 = vector.extract_strided_slice %259 {offsets = [0, 0], sizes = [2, 16], strides = [1, 1]} : vector<2x64xf32> to vector<2x16xf32>
    %261 = arith.negf %260 : vector<2x16xf32>
    %262 = math.exp %261 : vector<2x16xf32>
    %cst_65 = arith.constant 1.000000e+00 : f32
    %263 = vector.broadcast %cst_65 : f32 to vector<2x16xf32>
    %264 = arith.addf %263, %262 : vector<2x16xf32>
    %265 = arith.divf %263, %264 : vector<2x16xf32>
    %266 = vector.extract_strided_slice %259 {offsets = [0, 16], sizes = [2, 16], strides = [1, 1]} : vector<2x64xf32> to vector<2x16xf32>
    %267 = arith.negf %266 : vector<2x16xf32>
    %268 = math.exp %267 : vector<2x16xf32>
    %cst_66 = arith.constant 1.000000e+00 : f32
    %269 = vector.broadcast %cst_66 : f32 to vector<2x16xf32>
    %270 = arith.addf %269, %268 : vector<2x16xf32>
    %271 = arith.divf %269, %270 : vector<2x16xf32>
    %272 = vector.extract_strided_slice %259 {offsets = [0, 32], sizes = [2, 16], strides = [1, 1]} : vector<2x64xf32> to vector<2x16xf32>
    %273 = math.tanh %272 : vector<2x16xf32>
    %274 = vector.extract_strided_slice %259 {offsets = [0, 48], sizes = [2, 16], strides = [1, 1]} : vector<2x64xf32> to vector<2x16xf32>
    %275 = arith.negf %274 : vector<2x16xf32>
    %276 = math.exp %275 : vector<2x16xf32>
    %cst_67 = arith.constant 1.000000e+00 : f32
    %277 = vector.broadcast %cst_67 : f32 to vector<2x16xf32>
    %278 = arith.addf %277, %276 : vector<2x16xf32>
    %279 = arith.divf %277, %278 : vector<2x16xf32>
    %280 = arith.mulf %271, %215 : vector<2x16xf32>
    %281 = arith.mulf %265, %273 : vector<2x16xf32>
    %282 = arith.addf %280, %281 : vector<2x16xf32>
    %283 = math.tanh %282 : vector<2x16xf32>
    %284 = arith.mulf %279, %283 : vector<2x16xf32>
    %285 = vector.broadcast %c3_i32 : i32 to vector<2x1xi32>
    %286 = arith.cmpi slt, %285, %20 : vector<2x1xi32>
    %287 = vector.shape_cast %286 : vector<2x1xi1> to vector<2x1xi1>
    %288 = vector.broadcast %287 : vector<2x1xi1> to vector<2x16xi1>
    %289 = arith.select %288, %284, %212 : vector<2x16xi1>, vector<2x16xf32>
    %290 = vector.shape_cast %286 : vector<2x1xi1> to vector<2x1xi1>
    %291 = vector.broadcast %290 : vector<2x1xi1> to vector<2x16xi1>
    %292 = arith.select %291, %282, %215 : vector<2x16xi1>, vector<2x16xf32>
    %c7_i32_68 = arith.constant 7 : i32
    %293 = arith.subi %c7_i32_68, %c3_i32 : i32
    %c2_i32_69 = arith.constant 2 : i32
    %294 = arith.muli %293, %c2_i32_69 : i32
    %295 = arith.index_cast %294 : i32 to index
    %c0_70 = arith.constant 0 : index
    %296 = vector.load %arg14[%295, %c0_70] : memref<16x64xf32, #tpu.memory_space<vmem>>, vector<2x64xf32>
    %cst_71 = arith.constant dense<0.000000e+00> : vector<2x64xf32>
    %297 = tpu.matmul %251, %22, %cst_71 {dimension_numbers = #tpu.dot_dimension_numbers<[1], [0], [0], [1], [0, 0, 1, 1], [], []>} : vector<2x16xf32>, vector<16x64xf32>, vector<2x64xf32> -> vector<2x64xf32>
    %298 = arith.addf %296, %297 : vector<2x64xf32>
    %299 = vector.extract_strided_slice %298 {offsets = [0, 0], sizes = [2, 16], strides = [1, 1]} : vector<2x64xf32> to vector<2x16xf32>
    %300 = arith.negf %299 : vector<2x16xf32>
    %301 = math.exp %300 : vector<2x16xf32>
    %cst_72 = arith.constant 1.000000e+00 : f32
    %302 = vector.broadcast %cst_72 : f32 to vector<2x16xf32>
    %303 = arith.addf %302, %301 : vector<2x16xf32>
    %304 = arith.divf %302, %303 : vector<2x16xf32>
    %305 = vector.extract_strided_slice %298 {offsets = [0, 16], sizes = [2, 16], strides = [1, 1]} : vector<2x64xf32> to vector<2x16xf32>
    %306 = arith.negf %305 : vector<2x16xf32>
    %307 = math.exp %306 : vector<2x16xf32>
    %cst_73 = arith.constant 1.000000e+00 : f32
    %308 = vector.broadcast %cst_73 : f32 to vector<2x16xf32>
    %309 = arith.addf %308, %307 : vector<2x16xf32>
    %310 = arith.divf %308, %309 : vector<2x16xf32>
    %311 = vector.extract_strided_slice %298 {offsets = [0, 32], sizes = [2, 16], strides = [1, 1]} : vector<2x64xf32> to vector<2x16xf32>
    %312 = math.tanh %311 : vector<2x16xf32>
    %313 = vector.extract_strided_slice %298 {offsets = [0, 48], sizes = [2, 16], strides = [1, 1]} : vector<2x64xf32> to vector<2x16xf32>
    %314 = arith.negf %313 : vector<2x16xf32>
    %315 = math.exp %314 : vector<2x16xf32>
    %cst_74 = arith.constant 1.000000e+00 : f32
    %316 = vector.broadcast %cst_74 : f32 to vector<2x16xf32>
    %317 = arith.addf %316, %315 : vector<2x16xf32>
    %318 = arith.divf %316, %317 : vector<2x16xf32>
    %319 = arith.mulf %310, %254 : vector<2x16xf32>
    %320 = arith.mulf %304, %312 : vector<2x16xf32>
    %321 = arith.addf %319, %320 : vector<2x16xf32>
    %322 = math.tanh %321 : vector<2x16xf32>
    %323 = arith.mulf %318, %322 : vector<2x16xf32>
    %324 = vector.broadcast %293 : i32 to vector<2x1xi32>
    %325 = arith.cmpi slt, %324, %20 : vector<2x1xi32>
    %326 = vector.shape_cast %325 : vector<2x1xi1> to vector<2x1xi1>
    %327 = vector.broadcast %326 : vector<2x1xi1> to vector<2x16xi1>
    %328 = arith.select %327, %323, %251 : vector<2x16xi1>, vector<2x16xf32>
    %329 = vector.shape_cast %325 : vector<2x1xi1> to vector<2x1xi1>
    %330 = vector.broadcast %329 : vector<2x1xi1> to vector<2x16xi1>
    %331 = arith.select %330, %321, %254 : vector<2x16xi1>, vector<2x16xf32>
    %c4_i32 = arith.constant 4 : i32
    %c2_i32_75 = arith.constant 2 : i32
    %332 = arith.muli %c4_i32, %c2_i32_75 : i32
    %333 = arith.index_cast %332 : i32 to index
    %c0_76 = arith.constant 0 : index
    %334 = vector.load %arg13[%333, %c0_76] : memref<16x64xf32, #tpu.memory_space<vmem>>, vector<2x64xf32>
    %cst_77 = arith.constant dense<0.000000e+00> : vector<2x64xf32>
    %335 = tpu.matmul %289, %21, %cst_77 {dimension_numbers = #tpu.dot_dimension_numbers<[1], [0], [0], [1], [0, 0, 1, 1], [], []>} : vector<2x16xf32>, vector<16x64xf32>, vector<2x64xf32> -> vector<2x64xf32>
    %336 = arith.addf %334, %335 : vector<2x64xf32>
    %337 = vector.extract_strided_slice %336 {offsets = [0, 0], sizes = [2, 16], strides = [1, 1]} : vector<2x64xf32> to vector<2x16xf32>
    %338 = arith.negf %337 : vector<2x16xf32>
    %339 = math.exp %338 : vector<2x16xf32>
    %cst_78 = arith.constant 1.000000e+00 : f32
    %340 = vector.broadcast %cst_78 : f32 to vector<2x16xf32>
    %341 = arith.addf %340, %339 : vector<2x16xf32>
    %342 = arith.divf %340, %341 : vector<2x16xf32>
    %343 = vector.extract_strided_slice %336 {offsets = [0, 16], sizes = [2, 16], strides = [1, 1]} : vector<2x64xf32> to vector<2x16xf32>
    %344 = arith.negf %343 : vector<2x16xf32>
    %345 = math.exp %344 : vector<2x16xf32>
    %cst_79 = arith.constant 1.000000e+00 : f32
    %346 = vector.broadcast %cst_79 : f32 to vector<2x16xf32>
    %347 = arith.addf %346, %345 : vector<2x16xf32>
    %348 = arith.divf %346, %347 : vector<2x16xf32>
    %349 = vector.extract_strided_slice %336 {offsets = [0, 32], sizes = [2, 16], strides = [1, 1]} : vector<2x64xf32> to vector<2x16xf32>
    %350 = math.tanh %349 : vector<2x16xf32>
    %351 = vector.extract_strided_slice %336 {offsets = [0, 48], sizes = [2, 16], strides = [1, 1]} : vector<2x64xf32> to vector<2x16xf32>
    %352 = arith.negf %351 : vector<2x16xf32>
    %353 = math.exp %352 : vector<2x16xf32>
    %cst_80 = arith.constant 1.000000e+00 : f32
    %354 = vector.broadcast %cst_80 : f32 to vector<2x16xf32>
    %355 = arith.addf %354, %353 : vector<2x16xf32>
    %356 = arith.divf %354, %355 : vector<2x16xf32>
    %357 = arith.mulf %348, %292 : vector<2x16xf32>
    %358 = arith.mulf %342, %350 : vector<2x16xf32>
    %359 = arith.addf %357, %358 : vector<2x16xf32>
    %360 = math.tanh %359 : vector<2x16xf32>
    %361 = arith.mulf %356, %360 : vector<2x16xf32>
    %362 = vector.broadcast %c4_i32 : i32 to vector<2x1xi32>
    %363 = arith.cmpi slt, %362, %20 : vector<2x1xi32>
    %364 = vector.shape_cast %363 : vector<2x1xi1> to vector<2x1xi1>
    %365 = vector.broadcast %364 : vector<2x1xi1> to vector<2x16xi1>
    %366 = arith.select %365, %361, %289 : vector<2x16xi1>, vector<2x16xf32>
    %367 = vector.shape_cast %363 : vector<2x1xi1> to vector<2x1xi1>
    %368 = vector.broadcast %367 : vector<2x1xi1> to vector<2x16xi1>
    %369 = arith.select %368, %359, %292 : vector<2x16xi1>, vector<2x16xf32>
    %c7_i32_81 = arith.constant 7 : i32
    %370 = arith.subi %c7_i32_81, %c4_i32 : i32
    %c2_i32_82 = arith.constant 2 : i32
    %371 = arith.muli %370, %c2_i32_82 : i32
    %372 = arith.index_cast %371 : i32 to index
    %c0_83 = arith.constant 0 : index
    %373 = vector.load %arg14[%372, %c0_83] : memref<16x64xf32, #tpu.memory_space<vmem>>, vector<2x64xf32>
    %cst_84 = arith.constant dense<0.000000e+00> : vector<2x64xf32>
    %374 = tpu.matmul %328, %22, %cst_84 {dimension_numbers = #tpu.dot_dimension_numbers<[1], [0], [0], [1], [0, 0, 1, 1], [], []>} : vector<2x16xf32>, vector<16x64xf32>, vector<2x64xf32> -> vector<2x64xf32>
    %375 = arith.addf %373, %374 : vector<2x64xf32>
    %376 = vector.extract_strided_slice %375 {offsets = [0, 0], sizes = [2, 16], strides = [1, 1]} : vector<2x64xf32> to vector<2x16xf32>
    %377 = arith.negf %376 : vector<2x16xf32>
    %378 = math.exp %377 : vector<2x16xf32>
    %cst_85 = arith.constant 1.000000e+00 : f32
    %379 = vector.broadcast %cst_85 : f32 to vector<2x16xf32>
    %380 = arith.addf %379, %378 : vector<2x16xf32>
    %381 = arith.divf %379, %380 : vector<2x16xf32>
    %382 = vector.extract_strided_slice %375 {offsets = [0, 16], sizes = [2, 16], strides = [1, 1]} : vector<2x64xf32> to vector<2x16xf32>
    %383 = arith.negf %382 : vector<2x16xf32>
    %384 = math.exp %383 : vector<2x16xf32>
    %cst_86 = arith.constant 1.000000e+00 : f32
    %385 = vector.broadcast %cst_86 : f32 to vector<2x16xf32>
    %386 = arith.addf %385, %384 : vector<2x16xf32>
    %387 = arith.divf %385, %386 : vector<2x16xf32>
    %388 = vector.extract_strided_slice %375 {offsets = [0, 32], sizes = [2, 16], strides = [1, 1]} : vector<2x64xf32> to vector<2x16xf32>
    %389 = math.tanh %388 : vector<2x16xf32>
    %390 = vector.extract_strided_slice %375 {offsets = [0, 48], sizes = [2, 16], strides = [1, 1]} : vector<2x64xf32> to vector<2x16xf32>
    %391 = arith.negf %390 : vector<2x16xf32>
    %392 = math.exp %391 : vector<2x16xf32>
    %cst_87 = arith.constant 1.000000e+00 : f32
    %393 = vector.broadcast %cst_87 : f32 to vector<2x16xf32>
    %394 = arith.addf %393, %392 : vector<2x16xf32>
    %395 = arith.divf %393, %394 : vector<2x16xf32>
    %396 = arith.mulf %387, %331 : vector<2x16xf32>
    %397 = arith.mulf %381, %389 : vector<2x16xf32>
    %398 = arith.addf %396, %397 : vector<2x16xf32>
    %399 = math.tanh %398 : vector<2x16xf32>
    %400 = arith.mulf %395, %399 : vector<2x16xf32>
    %401 = vector.broadcast %370 : i32 to vector<2x1xi32>
    %402 = arith.cmpi slt, %401, %20 : vector<2x1xi32>
    %403 = vector.shape_cast %402 : vector<2x1xi1> to vector<2x1xi1>
    %404 = vector.broadcast %403 : vector<2x1xi1> to vector<2x16xi1>
    %405 = arith.select %404, %400, %328 : vector<2x16xi1>, vector<2x16xf32>
    %406 = vector.shape_cast %402 : vector<2x1xi1> to vector<2x1xi1>
    %407 = vector.broadcast %406 : vector<2x1xi1> to vector<2x16xi1>
    %408 = arith.select %407, %398, %331 : vector<2x16xi1>, vector<2x16xf32>
    %c5_i32 = arith.constant 5 : i32
    %c2_i32_88 = arith.constant 2 : i32
    %409 = arith.muli %c5_i32, %c2_i32_88 : i32
    %410 = arith.index_cast %409 : i32 to index
    %c0_89 = arith.constant 0 : index
    %411 = vector.load %arg13[%410, %c0_89] : memref<16x64xf32, #tpu.memory_space<vmem>>, vector<2x64xf32>
    %cst_90 = arith.constant dense<0.000000e+00> : vector<2x64xf32>
    %412 = tpu.matmul %366, %21, %cst_90 {dimension_numbers = #tpu.dot_dimension_numbers<[1], [0], [0], [1], [0, 0, 1, 1], [], []>} : vector<2x16xf32>, vector<16x64xf32>, vector<2x64xf32> -> vector<2x64xf32>
    %413 = arith.addf %411, %412 : vector<2x64xf32>
    %414 = vector.extract_strided_slice %413 {offsets = [0, 0], sizes = [2, 16], strides = [1, 1]} : vector<2x64xf32> to vector<2x16xf32>
    %415 = arith.negf %414 : vector<2x16xf32>
    %416 = math.exp %415 : vector<2x16xf32>
    %cst_91 = arith.constant 1.000000e+00 : f32
    %417 = vector.broadcast %cst_91 : f32 to vector<2x16xf32>
    %418 = arith.addf %417, %416 : vector<2x16xf32>
    %419 = arith.divf %417, %418 : vector<2x16xf32>
    %420 = vector.extract_strided_slice %413 {offsets = [0, 16], sizes = [2, 16], strides = [1, 1]} : vector<2x64xf32> to vector<2x16xf32>
    %421 = arith.negf %420 : vector<2x16xf32>
    %422 = math.exp %421 : vector<2x16xf32>
    %cst_92 = arith.constant 1.000000e+00 : f32
    %423 = vector.broadcast %cst_92 : f32 to vector<2x16xf32>
    %424 = arith.addf %423, %422 : vector<2x16xf32>
    %425 = arith.divf %423, %424 : vector<2x16xf32>
    %426 = vector.extract_strided_slice %413 {offsets = [0, 32], sizes = [2, 16], strides = [1, 1]} : vector<2x64xf32> to vector<2x16xf32>
    %427 = math.tanh %426 : vector<2x16xf32>
    %428 = vector.extract_strided_slice %413 {offsets = [0, 48], sizes = [2, 16], strides = [1, 1]} : vector<2x64xf32> to vector<2x16xf32>
    %429 = arith.negf %428 : vector<2x16xf32>
    %430 = math.exp %429 : vector<2x16xf32>
    %cst_93 = arith.constant 1.000000e+00 : f32
    %431 = vector.broadcast %cst_93 : f32 to vector<2x16xf32>
    %432 = arith.addf %431, %430 : vector<2x16xf32>
    %433 = arith.divf %431, %432 : vector<2x16xf32>
    %434 = arith.mulf %425, %369 : vector<2x16xf32>
    %435 = arith.mulf %419, %427 : vector<2x16xf32>
    %436 = arith.addf %434, %435 : vector<2x16xf32>
    %437 = math.tanh %436 : vector<2x16xf32>
    %438 = arith.mulf %433, %437 : vector<2x16xf32>
    %439 = vector.broadcast %c5_i32 : i32 to vector<2x1xi32>
    %440 = arith.cmpi slt, %439, %20 : vector<2x1xi32>
    %441 = vector.shape_cast %440 : vector<2x1xi1> to vector<2x1xi1>
    %442 = vector.broadcast %441 : vector<2x1xi1> to vector<2x16xi1>
    %443 = arith.select %442, %438, %366 : vector<2x16xi1>, vector<2x16xf32>
    %444 = vector.shape_cast %440 : vector<2x1xi1> to vector<2x1xi1>
    %445 = vector.broadcast %444 : vector<2x1xi1> to vector<2x16xi1>
    %446 = arith.select %445, %436, %369 : vector<2x16xi1>, vector<2x16xf32>
    %c7_i32_94 = arith.constant 7 : i32
    %447 = arith.subi %c7_i32_94, %c5_i32 : i32
    %c2_i32_95 = arith.constant 2 : i32
    %448 = arith.muli %447, %c2_i32_95 : i32
    %449 = arith.index_cast %448 : i32 to index
    %c0_96 = arith.constant 0 : index
    %450 = vector.load %arg14[%449, %c0_96] : memref<16x64xf32, #tpu.memory_space<vmem>>, vector<2x64xf32>
    %cst_97 = arith.constant dense<0.000000e+00> : vector<2x64xf32>
    %451 = tpu.matmul %405, %22, %cst_97 {dimension_numbers = #tpu.dot_dimension_numbers<[1], [0], [0], [1], [0, 0, 1, 1], [], []>} : vector<2x16xf32>, vector<16x64xf32>, vector<2x64xf32> -> vector<2x64xf32>
    %452 = arith.addf %450, %451 : vector<2x64xf32>
    %453 = vector.extract_strided_slice %452 {offsets = [0, 0], sizes = [2, 16], strides = [1, 1]} : vector<2x64xf32> to vector<2x16xf32>
    %454 = arith.negf %453 : vector<2x16xf32>
    %455 = math.exp %454 : vector<2x16xf32>
    %cst_98 = arith.constant 1.000000e+00 : f32
    %456 = vector.broadcast %cst_98 : f32 to vector<2x16xf32>
    %457 = arith.addf %456, %455 : vector<2x16xf32>
    %458 = arith.divf %456, %457 : vector<2x16xf32>
    %459 = vector.extract_strided_slice %452 {offsets = [0, 16], sizes = [2, 16], strides = [1, 1]} : vector<2x64xf32> to vector<2x16xf32>
    %460 = arith.negf %459 : vector<2x16xf32>
    %461 = math.exp %460 : vector<2x16xf32>
    %cst_99 = arith.constant 1.000000e+00 : f32
    %462 = vector.broadcast %cst_99 : f32 to vector<2x16xf32>
    %463 = arith.addf %462, %461 : vector<2x16xf32>
    %464 = arith.divf %462, %463 : vector<2x16xf32>
    %465 = vector.extract_strided_slice %452 {offsets = [0, 32], sizes = [2, 16], strides = [1, 1]} : vector<2x64xf32> to vector<2x16xf32>
    %466 = math.tanh %465 : vector<2x16xf32>
    %467 = vector.extract_strided_slice %452 {offsets = [0, 48], sizes = [2, 16], strides = [1, 1]} : vector<2x64xf32> to vector<2x16xf32>
    %468 = arith.negf %467 : vector<2x16xf32>
    %469 = math.exp %468 : vector<2x16xf32>
    %cst_100 = arith.constant 1.000000e+00 : f32
    %470 = vector.broadcast %cst_100 : f32 to vector<2x16xf32>
    %471 = arith.addf %470, %469 : vector<2x16xf32>
    %472 = arith.divf %470, %471 : vector<2x16xf32>
    %473 = arith.mulf %464, %408 : vector<2x16xf32>
    %474 = arith.mulf %458, %466 : vector<2x16xf32>
    %475 = arith.addf %473, %474 : vector<2x16xf32>
    %476 = math.tanh %475 : vector<2x16xf32>
    %477 = arith.mulf %472, %476 : vector<2x16xf32>
    %478 = vector.broadcast %447 : i32 to vector<2x1xi32>
    %479 = arith.cmpi slt, %478, %20 : vector<2x1xi32>
    %480 = vector.shape_cast %479 : vector<2x1xi1> to vector<2x1xi1>
    %481 = vector.broadcast %480 : vector<2x1xi1> to vector<2x16xi1>
    %482 = arith.select %481, %477, %405 : vector<2x16xi1>, vector<2x16xf32>
    %483 = vector.shape_cast %479 : vector<2x1xi1> to vector<2x1xi1>
    %484 = vector.broadcast %483 : vector<2x1xi1> to vector<2x16xi1>
    %485 = arith.select %484, %475, %408 : vector<2x16xi1>, vector<2x16xf32>
    %c6_i32 = arith.constant 6 : i32
    %c2_i32_101 = arith.constant 2 : i32
    %486 = arith.muli %c6_i32, %c2_i32_101 : i32
    %487 = arith.index_cast %486 : i32 to index
    %c0_102 = arith.constant 0 : index
    %488 = vector.load %arg13[%487, %c0_102] : memref<16x64xf32, #tpu.memory_space<vmem>>, vector<2x64xf32>
    %cst_103 = arith.constant dense<0.000000e+00> : vector<2x64xf32>
    %489 = tpu.matmul %443, %21, %cst_103 {dimension_numbers = #tpu.dot_dimension_numbers<[1], [0], [0], [1], [0, 0, 1, 1], [], []>} : vector<2x16xf32>, vector<16x64xf32>, vector<2x64xf32> -> vector<2x64xf32>
    %490 = arith.addf %488, %489 : vector<2x64xf32>
    %491 = vector.extract_strided_slice %490 {offsets = [0, 0], sizes = [2, 16], strides = [1, 1]} : vector<2x64xf32> to vector<2x16xf32>
    %492 = arith.negf %491 : vector<2x16xf32>
    %493 = math.exp %492 : vector<2x16xf32>
    %cst_104 = arith.constant 1.000000e+00 : f32
    %494 = vector.broadcast %cst_104 : f32 to vector<2x16xf32>
    %495 = arith.addf %494, %493 : vector<2x16xf32>
    %496 = arith.divf %494, %495 : vector<2x16xf32>
    %497 = vector.extract_strided_slice %490 {offsets = [0, 16], sizes = [2, 16], strides = [1, 1]} : vector<2x64xf32> to vector<2x16xf32>
    %498 = arith.negf %497 : vector<2x16xf32>
    %499 = math.exp %498 : vector<2x16xf32>
    %cst_105 = arith.constant 1.000000e+00 : f32
    %500 = vector.broadcast %cst_105 : f32 to vector<2x16xf32>
    %501 = arith.addf %500, %499 : vector<2x16xf32>
    %502 = arith.divf %500, %501 : vector<2x16xf32>
    %503 = vector.extract_strided_slice %490 {offsets = [0, 32], sizes = [2, 16], strides = [1, 1]} : vector<2x64xf32> to vector<2x16xf32>
    %504 = math.tanh %503 : vector<2x16xf32>
    %505 = vector.extract_strided_slice %490 {offsets = [0, 48], sizes = [2, 16], strides = [1, 1]} : vector<2x64xf32> to vector<2x16xf32>
    %506 = arith.negf %505 : vector<2x16xf32>
    %507 = math.exp %506 : vector<2x16xf32>
    %cst_106 = arith.constant 1.000000e+00 : f32
    %508 = vector.broadcast %cst_106 : f32 to vector<2x16xf32>
    %509 = arith.addf %508, %507 : vector<2x16xf32>
    %510 = arith.divf %508, %509 : vector<2x16xf32>
    %511 = arith.mulf %502, %446 : vector<2x16xf32>
    %512 = arith.mulf %496, %504 : vector<2x16xf32>
    %513 = arith.addf %511, %512 : vector<2x16xf32>
    %514 = math.tanh %513 : vector<2x16xf32>
    %515 = arith.mulf %510, %514 : vector<2x16xf32>
    %516 = vector.broadcast %c6_i32 : i32 to vector<2x1xi32>
    %517 = arith.cmpi slt, %516, %20 : vector<2x1xi32>
    %518 = vector.shape_cast %517 : vector<2x1xi1> to vector<2x1xi1>
    %519 = vector.broadcast %518 : vector<2x1xi1> to vector<2x16xi1>
    %520 = arith.select %519, %515, %443 : vector<2x16xi1>, vector<2x16xf32>
    %521 = vector.shape_cast %517 : vector<2x1xi1> to vector<2x1xi1>
    %522 = vector.broadcast %521 : vector<2x1xi1> to vector<2x16xi1>
    %523 = arith.select %522, %513, %446 : vector<2x16xi1>, vector<2x16xf32>
    %c7_i32_107 = arith.constant 7 : i32
    %524 = arith.subi %c7_i32_107, %c6_i32 : i32
    %c2_i32_108 = arith.constant 2 : i32
    %525 = arith.muli %524, %c2_i32_108 : i32
    %526 = arith.index_cast %525 : i32 to index
    %c0_109 = arith.constant 0 : index
    %527 = vector.load %arg14[%526, %c0_109] : memref<16x64xf32, #tpu.memory_space<vmem>>, vector<2x64xf32>
    %cst_110 = arith.constant dense<0.000000e+00> : vector<2x64xf32>
    %528 = tpu.matmul %482, %22, %cst_110 {dimension_numbers = #tpu.dot_dimension_numbers<[1], [0], [0], [1], [0, 0, 1, 1], [], []>} : vector<2x16xf32>, vector<16x64xf32>, vector<2x64xf32> -> vector<2x64xf32>
    %529 = arith.addf %527, %528 : vector<2x64xf32>
    %530 = vector.extract_strided_slice %529 {offsets = [0, 0], sizes = [2, 16], strides = [1, 1]} : vector<2x64xf32> to vector<2x16xf32>
    %531 = arith.negf %530 : vector<2x16xf32>
    %532 = math.exp %531 : vector<2x16xf32>
    %cst_111 = arith.constant 1.000000e+00 : f32
    %533 = vector.broadcast %cst_111 : f32 to vector<2x16xf32>
    %534 = arith.addf %533, %532 : vector<2x16xf32>
    %535 = arith.divf %533, %534 : vector<2x16xf32>
    %536 = vector.extract_strided_slice %529 {offsets = [0, 16], sizes = [2, 16], strides = [1, 1]} : vector<2x64xf32> to vector<2x16xf32>
    %537 = arith.negf %536 : vector<2x16xf32>
    %538 = math.exp %537 : vector<2x16xf32>
    %cst_112 = arith.constant 1.000000e+00 : f32
    %539 = vector.broadcast %cst_112 : f32 to vector<2x16xf32>
    %540 = arith.addf %539, %538 : vector<2x16xf32>
    %541 = arith.divf %539, %540 : vector<2x16xf32>
    %542 = vector.extract_strided_slice %529 {offsets = [0, 32], sizes = [2, 16], strides = [1, 1]} : vector<2x64xf32> to vector<2x16xf32>
    %543 = math.tanh %542 : vector<2x16xf32>
    %544 = vector.extract_strided_slice %529 {offsets = [0, 48], sizes = [2, 16], strides = [1, 1]} : vector<2x64xf32> to vector<2x16xf32>
    %545 = arith.negf %544 : vector<2x16xf32>
    %546 = math.exp %545 : vector<2x16xf32>
    %cst_113 = arith.constant 1.000000e+00 : f32
    %547 = vector.broadcast %cst_113 : f32 to vector<2x16xf32>
    %548 = arith.addf %547, %546 : vector<2x16xf32>
    %549 = arith.divf %547, %548 : vector<2x16xf32>
    %550 = arith.mulf %541, %485 : vector<2x16xf32>
    %551 = arith.mulf %535, %543 : vector<2x16xf32>
    %552 = arith.addf %550, %551 : vector<2x16xf32>
    %553 = math.tanh %552 : vector<2x16xf32>
    %554 = arith.mulf %549, %553 : vector<2x16xf32>
    %555 = vector.broadcast %524 : i32 to vector<2x1xi32>
    %556 = arith.cmpi slt, %555, %20 : vector<2x1xi32>
    %557 = vector.shape_cast %556 : vector<2x1xi1> to vector<2x1xi1>
    %558 = vector.broadcast %557 : vector<2x1xi1> to vector<2x16xi1>
    %559 = arith.select %558, %554, %482 : vector<2x16xi1>, vector<2x16xf32>
    %560 = vector.shape_cast %556 : vector<2x1xi1> to vector<2x1xi1>
    %561 = vector.broadcast %560 : vector<2x1xi1> to vector<2x16xi1>
    %562 = arith.select %561, %552, %485 : vector<2x16xi1>, vector<2x16xf32>
    %c7_i32_114 = arith.constant 7 : i32
    %c2_i32_115 = arith.constant 2 : i32
    %563 = arith.muli %c7_i32_114, %c2_i32_115 : i32
    %564 = arith.index_cast %563 : i32 to index
    %c0_116 = arith.constant 0 : index
    %565 = vector.load %arg13[%564, %c0_116] : memref<16x64xf32, #tpu.memory_space<vmem>>, vector<2x64xf32>
    %cst_117 = arith.constant dense<0.000000e+00> : vector<2x64xf32>
    %566 = tpu.matmul %520, %21, %cst_117 {dimension_numbers = #tpu.dot_dimension_numbers<[1], [0], [0], [1], [0, 0, 1, 1], [], []>} : vector<2x16xf32>, vector<16x64xf32>, vector<2x64xf32> -> vector<2x64xf32>
    %567 = arith.addf %565, %566 : vector<2x64xf32>
    %568 = vector.extract_strided_slice %567 {offsets = [0, 0], sizes = [2, 16], strides = [1, 1]} : vector<2x64xf32> to vector<2x16xf32>
    %569 = arith.negf %568 : vector<2x16xf32>
    %570 = math.exp %569 : vector<2x16xf32>
    %cst_118 = arith.constant 1.000000e+00 : f32
    %571 = vector.broadcast %cst_118 : f32 to vector<2x16xf32>
    %572 = arith.addf %571, %570 : vector<2x16xf32>
    %573 = arith.divf %571, %572 : vector<2x16xf32>
    %574 = vector.extract_strided_slice %567 {offsets = [0, 16], sizes = [2, 16], strides = [1, 1]} : vector<2x64xf32> to vector<2x16xf32>
    %575 = arith.negf %574 : vector<2x16xf32>
    %576 = math.exp %575 : vector<2x16xf32>
    %cst_119 = arith.constant 1.000000e+00 : f32
    %577 = vector.broadcast %cst_119 : f32 to vector<2x16xf32>
    %578 = arith.addf %577, %576 : vector<2x16xf32>
    %579 = arith.divf %577, %578 : vector<2x16xf32>
    %580 = vector.extract_strided_slice %567 {offsets = [0, 32], sizes = [2, 16], strides = [1, 1]} : vector<2x64xf32> to vector<2x16xf32>
    %581 = math.tanh %580 : vector<2x16xf32>
    %582 = vector.extract_strided_slice %567 {offsets = [0, 48], sizes = [2, 16], strides = [1, 1]} : vector<2x64xf32> to vector<2x16xf32>
    %583 = arith.negf %582 : vector<2x16xf32>
    %584 = math.exp %583 : vector<2x16xf32>
    %cst_120 = arith.constant 1.000000e+00 : f32
    %585 = vector.broadcast %cst_120 : f32 to vector<2x16xf32>
    %586 = arith.addf %585, %584 : vector<2x16xf32>
    %587 = arith.divf %585, %586 : vector<2x16xf32>
    %588 = arith.mulf %579, %523 : vector<2x16xf32>
    %589 = arith.mulf %573, %581 : vector<2x16xf32>
    %590 = arith.addf %588, %589 : vector<2x16xf32>
    %591 = math.tanh %590 : vector<2x16xf32>
    %592 = arith.mulf %587, %591 : vector<2x16xf32>
    %593 = vector.broadcast %c7_i32_114 : i32 to vector<2x1xi32>
    %594 = arith.cmpi slt, %593, %20 : vector<2x1xi32>
    %595 = vector.shape_cast %594 : vector<2x1xi1> to vector<2x1xi1>
    %596 = vector.broadcast %595 : vector<2x1xi1> to vector<2x16xi1>
    %597 = arith.select %596, %592, %520 : vector<2x16xi1>, vector<2x16xf32>
    %598 = vector.shape_cast %594 : vector<2x1xi1> to vector<2x1xi1>
    %599 = vector.broadcast %598 : vector<2x1xi1> to vector<2x16xi1>
    %600 = arith.select %599, %590, %523 : vector<2x16xi1>, vector<2x16xf32>
    %c7_i32_121 = arith.constant 7 : i32
    %601 = arith.subi %c7_i32_121, %c7_i32_114 : i32
    %c2_i32_122 = arith.constant 2 : i32
    %602 = arith.muli %601, %c2_i32_122 : i32
    %603 = arith.index_cast %602 : i32 to index
    %c0_123 = arith.constant 0 : index
    %604 = vector.load %arg14[%603, %c0_123] : memref<16x64xf32, #tpu.memory_space<vmem>>, vector<2x64xf32>
    %cst_124 = arith.constant dense<0.000000e+00> : vector<2x64xf32>
    %605 = tpu.matmul %559, %22, %cst_124 {dimension_numbers = #tpu.dot_dimension_numbers<[1], [0], [0], [1], [0, 0, 1, 1], [], []>} : vector<2x16xf32>, vector<16x64xf32>, vector<2x64xf32> -> vector<2x64xf32>
    %606 = arith.addf %604, %605 : vector<2x64xf32>
    %607 = vector.extract_strided_slice %606 {offsets = [0, 0], sizes = [2, 16], strides = [1, 1]} : vector<2x64xf32> to vector<2x16xf32>
    %608 = arith.negf %607 : vector<2x16xf32>
    %609 = math.exp %608 : vector<2x16xf32>
    %cst_125 = arith.constant 1.000000e+00 : f32
    %610 = vector.broadcast %cst_125 : f32 to vector<2x16xf32>
    %611 = arith.addf %610, %609 : vector<2x16xf32>
    %612 = arith.divf %610, %611 : vector<2x16xf32>
    %613 = vector.extract_strided_slice %606 {offsets = [0, 16], sizes = [2, 16], strides = [1, 1]} : vector<2x64xf32> to vector<2x16xf32>
    %614 = arith.negf %613 : vector<2x16xf32>
    %615 = math.exp %614 : vector<2x16xf32>
    %cst_126 = arith.constant 1.000000e+00 : f32
    %616 = vector.broadcast %cst_126 : f32 to vector<2x16xf32>
    %617 = arith.addf %616, %615 : vector<2x16xf32>
    %618 = arith.divf %616, %617 : vector<2x16xf32>
    %619 = vector.extract_strided_slice %606 {offsets = [0, 32], sizes = [2, 16], strides = [1, 1]} : vector<2x64xf32> to vector<2x16xf32>
    %620 = math.tanh %619 : vector<2x16xf32>
    %621 = vector.extract_strided_slice %606 {offsets = [0, 48], sizes = [2, 16], strides = [1, 1]} : vector<2x64xf32> to vector<2x16xf32>
    %622 = arith.negf %621 : vector<2x16xf32>
    %623 = math.exp %622 : vector<2x16xf32>
    %cst_127 = arith.constant 1.000000e+00 : f32
    %624 = vector.broadcast %cst_127 : f32 to vector<2x16xf32>
    %625 = arith.addf %624, %623 : vector<2x16xf32>
    %626 = arith.divf %624, %625 : vector<2x16xf32>
    %627 = arith.mulf %618, %562 : vector<2x16xf32>
    %628 = arith.mulf %612, %620 : vector<2x16xf32>
    %629 = arith.addf %627, %628 : vector<2x16xf32>
    %630 = math.tanh %629 : vector<2x16xf32>
    %631 = arith.mulf %626, %630 : vector<2x16xf32>
    %632 = vector.broadcast %601 : i32 to vector<2x1xi32>
    %633 = arith.cmpi slt, %632, %20 : vector<2x1xi32>
    %634 = vector.shape_cast %633 : vector<2x1xi1> to vector<2x1xi1>
    %635 = vector.broadcast %634 : vector<2x1xi1> to vector<2x16xi1>
    %636 = arith.select %635, %631, %559 : vector<2x16xi1>, vector<2x16xf32>
    %637 = vector.shape_cast %633 : vector<2x1xi1> to vector<2x1xi1>
    %638 = vector.broadcast %637 : vector<2x1xi1> to vector<2x16xi1>
    %639 = arith.select %638, %629, %562 : vector<2x16xi1>, vector<2x16xf32>
    %c8_i32 = arith.constant 8 : i32
    %c0_128 = arith.constant 0 : index
    %c0_129 = arith.constant 0 : index
    %640 = vector.load %arg9[%c0_128, %c0_129] : memref<16x2xf32, #tpu.memory_space<vmem>>, vector<16x2xf32>
    %cst_130 = arith.constant dense<0.000000e+00> : vector<2x2xf32>
    %641 = tpu.matmul %597, %640, %cst_130 {dimension_numbers = #tpu.dot_dimension_numbers<[1], [0], [0], [1], [0, 0, 1, 1], [], []>} : vector<2x16xf32>, vector<16x2xf32>, vector<2x2xf32> -> vector<2x2xf32>
    %c0_131 = arith.constant 0 : index
    %c0_132 = arith.constant 0 : index
    %642 = vector.load %arg10[%c0_131, %c0_132] : memref<16x2xf32, #tpu.memory_space<vmem>>, vector<16x2xf32>
    %cst_133 = arith.constant dense<0.000000e+00> : vector<2x2xf32>
    %643 = tpu.matmul %636, %642, %cst_133 {dimension_numbers = #tpu.dot_dimension_numbers<[1], [0], [0], [1], [0, 0, 1, 1], [], []>} : vector<2x16xf32>, vector<16x2xf32>, vector<2x2xf32> -> vector<2x2xf32>
    %644 = arith.addf %641, %643 : vector<2x2xf32>
    %c0_134 = arith.constant 0 : index
    %c0_135 = arith.constant 0 : index
    %645 = vector.load %arg11[%c0_134, %c0_135] : memref<1x2xf32, #tpu.memory_space<vmem>>, vector<1x2xf32>
    %646 = vector.broadcast %645 : vector<1x2xf32> to vector<2x2xf32>
    %647 = arith.addf %644, %646 : vector<2x2xf32>
    %c0_136 = arith.constant 0 : index
    %c0_137 = arith.constant 0 : index
    %648 = vector.load %arg12[%c0_136, %c0_137] : memref<2x2xf32, #tpu.memory_space<vmem>>, vector<2x2xf32>
    tpu.vector_store %arg12[%c0_136, %c0_137], %647 {strides = array<i32>} : memref<2x2xf32, #tpu.memory_space<vmem>>, vector<2x2xf32>,
    return
  }
}

</mosaic_0001>

<llo_original>
// kernel: tpu_custom_call.1
$region0: #{tpu_custom_call.1}
  #allocation0 [shape = 'u32[]', space=smem, size = 0x4, offset = 0x4, fixed_abs, tag = 'smem constant byte address 0x4 - core index']
  #allocation1 [shape = 'u32[72,128]{1,0:T(1,128)}', space=vmem, size = 0x9000, scoped, tag = 'internal scratch']
  #allocation2 [shape = 'f32[16,64]{1,0:T(8,128)}', space=vmem, size = 0x2000, scoped, tag = 'scratch operand']
  #allocation3 [shape = 'f32[16,64]{1,0:T(8,128)}', space=vmem, size = 0x2000, scoped, tag = 'scratch operand']
  %s0 = inlined_call_operand.vmem [shape: s32[16,1], index: 0, kind: input, shape index: {}]
  %s1 = inlined_call_operand.vmem [shape: s32[2,1], index: 1, kind: input, shape index: {}]
  %s2 = inlined_call_operand.vmem [shape: f32[32,16], index: 2, kind: input, shape index: {}]
  %s3 = inlined_call_operand.vmem [shape: f32[16,64], index: 3, kind: input, shape index: {}]
  %s4 = inlined_call_operand.vmem [shape: f32[16,64], index: 4, kind: input, shape index: {}]
  %s5 = inlined_call_operand.vmem [shape: f32[1,64], index: 5, kind: input, shape index: {}]
  %s6 = inlined_call_operand.vmem [shape: f32[16,64], index: 6, kind: input, shape index: {}]
  %s7 = inlined_call_operand.vmem [shape: f32[16,64], index: 7, kind: input, shape index: {}]
  %s8 = inlined_call_operand.vmem [shape: f32[1,64], index: 8, kind: input, shape index: {}]
  %s9 = inlined_call_operand.vmem [shape: f32[16,2], index: 9, kind: input, shape index: {}]
  %s10 = inlined_call_operand.vmem [shape: f32[16,2], index: 10, kind: input, shape index: {}]
  %s11 = inlined_call_operand.vmem [shape: f32[1,2], index: 11, kind: input, shape index: {}]
  %s12 = inlined_call_operand.hbm [shape: f32[2,2], index: 12, kind: output, shape index: {}]
  %s13 = sld [smem:[#allocation0]]
  $region58: #{tpu_custom_call.1} parent=0
    _
  %s15 = ssub.s32 1, %s13
  %s16 = scalar_select 0, %s15, %s13
  $region1: #{tpu_custom_call.1} parent=0
    #allocation4 [shape = 'u8[1024]{0}', space=vmem, size = 0x400, scoped, tag = 'output window, operand 0, single buffered']
    #allocation5 [shape = 's32[1]{0}', space=sflag, size = 0x4, scoped, tag = 'scoped memory for tpu_custom_call.1']
    %17 = vsyncpa [#allocation5], 0
    // Predicated region
    $region2: #{tpu_custom_call.1} parent=1 // pred_check
      _
    $region3: #{tpu_custom_call.1} parent=1 // pred_check_branch
      %19 = sbr.rel (0) target = $region5
    $region4: #{tpu_custom_call.1} parent=1 // pred_region
      _
    $region5: #{tpu_custom_call.1} parent=1 // pred_fallthru
      _
    // Predicated region
    $region6: #{tpu_custom_call.1} parent=1 // pred_check
      _
    $region7: #{tpu_custom_call.1} parent=1 // pred_check_branch
      %21 = sbr.rel (0) target = $region9
    $region8: #{tpu_custom_call.1} parent=1 // pred_region
      _
    $region9: #{tpu_custom_call.1} parent=1 // pred_fallthru
      _
    // Predicated region
    $region10: #{tpu_custom_call.1} parent=1 // pred_check
      _
    $region11: #{tpu_custom_call.1} parent=1 // pred_check_branch
      %23 = sbr.rel (0) target = $region13
    $region12: #{tpu_custom_call.1} parent=1 // pred_region
      _
    $region13: #{tpu_custom_call.1} parent=1 // pred_fallthru
      _
    // Predicated region
    $region14: #{tpu_custom_call.1} parent=1 // pred_check
      _
    $region15: #{tpu_custom_call.1} parent=1 // pred_check_branch
      %25 = sbr.rel (0) target = $region17
    $region16: #{tpu_custom_call.1} parent=1 // pred_region
      _
    $region17: #{tpu_custom_call.1} parent=1 // pred_fallthru
      _
    // Predicated region
    $region18: #{tpu_custom_call.1} parent=1 // pred_check
      _
    $region19: #{tpu_custom_call.1} parent=1 // pred_check_branch
      %27 = sbr.rel (0) target = $region21
    $region20: #{tpu_custom_call.1} parent=1 // pred_region
      _
    $region21: #{tpu_custom_call.1} parent=1 // pred_fallthru
      _
    // Predicated region
    $region22: #{tpu_custom_call.1} parent=1 // pred_check
      _
    $region23: #{tpu_custom_call.1} parent=1 // pred_check_branch
      %29 = sbr.rel (0) target = $region25
    $region24: #{tpu_custom_call.1} parent=1 // pred_region
      _
    $region25: #{tpu_custom_call.1} parent=1 // pred_fallthru
      _
    // Predicated region
    $region26: #{tpu_custom_call.1} parent=1 // pred_check
      _
    $region27: #{tpu_custom_call.1} parent=1 // pred_check_branch
      %31 = sbr.rel (0) target = $region29
    $region28: #{tpu_custom_call.1} parent=1 // pred_region
      _
    $region29: #{tpu_custom_call.1} parent=1 // pred_fallthru
      _
    // Predicated region
    $region30: #{tpu_custom_call.1} parent=1 // pred_check
      _
    $region31: #{tpu_custom_call.1} parent=1 // pred_check_branch
      %33 = sbr.rel (0) target = $region33
    $region32: #{tpu_custom_call.1} parent=1 // pred_region
      _
    $region33: #{tpu_custom_call.1} parent=1 // pred_fallthru
      _
    // Predicated region
    $region34: #{tpu_custom_call.1} parent=1 // pred_check
      _
    $region35: #{tpu_custom_call.1} parent=1 // pred_check_branch
      %35 = sbr.rel (0) target = $region37
    $region36: #{tpu_custom_call.1} parent=1 // pred_region
      _
    $region37: #{tpu_custom_call.1} parent=1 // pred_fallthru
      _
    // Predicated region
    $region38: #{tpu_custom_call.1} parent=1 // pred_check
      _
    $region39: #{tpu_custom_call.1} parent=1 // pred_check_branch
      %37 = sbr.rel (0) target = $region41
    $region40: #{tpu_custom_call.1} parent=1 // pred_region
      _
    $region41: #{tpu_custom_call.1} parent=1 // pred_fallthru
      _
    // Predicated region
    $region42: #{tpu_custom_call.1} parent=1 // pred_check
      _
    $region43: #{tpu_custom_call.1} parent=1 // pred_check_branch
      %39 = sbr.rel (0) target = $region45
    $region44: #{tpu_custom_call.1} parent=1 // pred_region
      _
    $region45: #{tpu_custom_call.1} parent=1 // pred_fallthru
      _
    // Predicated region
    $region46: #{tpu_custom_call.1} parent=1 // pred_check
      _
    $region47: #{tpu_custom_call.1} parent=1 // pred_check_branch
      %41 = sbr.rel (0) target = $region49
    $region48: #{tpu_custom_call.1} parent=1 // pred_region
      _
    $region49: #{tpu_custom_call.1} parent=1 // pred_fallthru
      _
    %v42 = vld [vmem:[%s0] sm:$0xff]
    %v43 = vld [vmem:[%s0 + $0x8] sm:$0xff]
    %v44 = vlaneseq
    %v45 = vand.u32 %v44, 127
    %46 = vset.pattern.permute.xlu0 0
    %47 = vperm.xlu0 %46, %v42
    %v48 = vpop.permute.xlu0 %47
    %49 = vset.pattern.permute.xlu0 0
    %50 = vperm.xlu0 %49, %v43
    %v51 = vpop.permute.xlu0 %50
    %vm52 = vcmp.eq.s32.totalorder %v45, %v48
    %vm53 = vcmp.eq.s32.totalorder %v45, %v51
    %v54 = vsel %vm52, 1, 0
    %v55 = vsel %vm53, 1, 0
    %v56 = vcvt.s32.f32 %v54
    %v57 = vcvt.s32.f32 %v55
    %v58 = vld [vmem:[%s2] sm:$0xff]
    %v59 = vld [vmem:[%s2 + $0x8] sm:$0xff]
    %v60 = vld [vmem:[%s2 + $0x10] sm:$0xff]
    %v61 = vld [vmem:[%s2 + $0x18] sm:$0xff]
    %vm62 = vcmask 261120
    %v64 = vsel %vm62, %v56, 0
    %v67 = vsel %vm62, %v57, 0
    %69 = vmatpush.msra.mxu0 0.0
    %70 = vmatpush.msra.mxu0 0.0
    %71 = vmatpush.msra.mxu0 0.0
    %72 = vmatpush.msra.mxu0 0.0
    %73 = vmatpush.msra.mxu0 0.0
    %74 = vmatpush.msra.mxu0 0.0
    %75 = vmatpush.msra.mxu0 0.0
    %76 = vmatpush.msra.mxu0 0.0
    %77 = vmatpush.msra.mxu0 0.0
    %78 = vmatpush.msra.mxu0 0.0
    %79 = vmatpush.msra.mxu0 0.0
    %80 = vmatpush.msra.mxu0 0.0
    %81 = vmatpush.msra.mxu0 %v61
    %82 = vmatpush.msra.mxu0 %v60
    %83 = vmatpush.msra.mxu0 %v59
    %84 = vmatpush.msra.mxu0 %v58
    %85 = vmatmul.f32.gmra.mxu0 %v64
    %v86 = vpop.f32.mrf.mxu0
    %v87 = vadd.f32 0.0, %v86
    %88 = vmatmul.f32.gmra.mxu0 %v67
    %v89 = vpop.f32.mrf.mxu0
    %v90 = vadd.f32 0.0, %v89
    %91 = vdwg.mxu0
    %v92 = vld [vmem:[%s3] sm:$0xff]
    %v93 = vld [vmem:[%s3 + $0x8] sm:$0xff]
    %v94 = vld [vmem:[%s5] sm:$0x1]
    %v96 = vperm.slane %v94, 0
    %vm98 = vcmask 130048
    %v100 = vsel %vm98, %v87, 0
    %v103 = vsel %vm98, %v90, 0
    %105 = vmatpush.msra.mxu0 0.0
    %106 = vmatpush.msra.mxu0 0.0
    %107 = vmatpush.msra.mxu0 0.0
    %108 = vmatpush.msra.mxu0 0.0
    %109 = vmatpush.msra.mxu0 0.0
    %110 = vmatpush.msra.mxu0 0.0
    %111 = vmatpush.msra.mxu0 0.0
    %112 = vmatpush.msra.mxu0 0.0
    %113 = vmatpush.msra.mxu0 0.0
    %114 = vmatpush.msra.mxu0 0.0
    %115 = vmatpush.msra.mxu0 0.0
    %116 = vmatpush.msra.mxu0 0.0
    %117 = vmatpush.msra.mxu0 0.0
    %118 = vmatpush.msra.mxu0 0.0
    %119 = vmatpush.msra.mxu0 %v93
    %120 = vmatpush.msra.mxu0 %v92
    %121 = vmatmul.f32.gmra.mxu0 %v100
    %v122 = vpop.f32.mrf.mxu0
    %v123 = vadd.f32 %v96, %v122
    %124 = vmatmul.f32.gmra.mxu0 %v103
    %v125 = vpop.f32.mrf.mxu0
    %v126 = vadd.f32 %v96, %v125
    %127 = vdwg.mxu0
    %vm128 = vcmask 523264
    %129 = vst.msk [vmem:[#allocation2] sm:$0xff] %vm128, %v123
    %130 = vst.msk [vmem:[#allocation2 + $0x8] sm:$0xff] %vm128, %v126
    %v131 = vld [vmem:[%s6] sm:$0xff]
    %v132 = vld [vmem:[%s6 + $0x8] sm:$0xff]
    %v133 = vld [vmem:[%s8] sm:$0x1]
    %v135 = vperm.slane %v133, 0
    %137 = vmatpush.msra.mxu0 0.0
    %138 = vmatpush.msra.mxu0 0.0
    %139 = vmatpush.msra.mxu0 0.0
    %140 = vmatpush.msra.mxu0 0.0
    %141 = vmatpush.msra.mxu0 0.0
    %142 = vmatpush.msra.mxu0 0.0
    %143 = vmatpush.msra.mxu0 0.0
    %144 = vmatpush.msra.mxu0 0.0
    %145 = vmatpush.msra.mxu0 0.0
    %146 = vmatpush.msra.mxu0 0.0
    %147 = vmatpush.msra.mxu0 0.0
    %148 = vmatpush.msra.mxu0 0.0
    %149 = vmatpush.msra.mxu0 0.0
    %150 = vmatpush.msra.mxu0 0.0
    %151 = vmatpush.msra.mxu0 %v132
    %152 = vmatpush.msra.mxu0 %v131
    %153 = vmatmul.f32.gmra.mxu0 %v100
    %v154 = vpop.f32.mrf.mxu0
    %v155 = vadd.f32 %v135, %v154
    %156 = vmatmul.f32.gmra.mxu0 %v103
    %v157 = vpop.f32.mrf.mxu0
    %v158 = vadd.f32 %v135, %v157
    %159 = vdwg.mxu0
    %160 = vst.msk [vmem:[#allocation3] sm:$0xff] %vm128, %v155
    %161 = vst.msk [vmem:[#allocation3 + $0x8] sm:$0xff] %vm128, %v158
    %v162 = vld [vmem:[%s1] sm:$0x3]
    %v163 = vld [vmem:[%s4] sm:$0xff]
    %v164 = vld [vmem:[%s4 + $0x8] sm:$0xff]
    %v165 = vld [vmem:[%s7] sm:$0xff]
    %v166 = vld [vmem:[%s7 + $0x8] sm:$0xff]
    %v167 = vld [vmem:[#allocation2] sm:$0x3]
    %v169 = vsel %vm98, 0.0, 0
    %171 = vmatpush.msra.mxu0 0.0
    %172 = vmatpush.msra.mxu0 0.0
    %173 = vmatpush.msra.mxu0 0.0
    %174 = vmatpush.msra.mxu0 0.0
    %175 = vmatpush.msra.mxu0 0.0
    %176 = vmatpush.msra.mxu0 0.0
    %177 = vmatpush.msra.mxu0 0.0
    %178 = vmatpush.msra.mxu0 0.0
    %179 = vmatpush.msra.mxu0 0.0
    %180 = vmatpush.msra.mxu0 0.0
    %181 = vmatpush.msra.mxu0 0.0
    %182 = vmatpush.msra.mxu0 0.0
    %183 = vmatpush.msra.mxu0 0.0
    %184 = vmatpush.msra.mxu0 0.0
    %185 = vmatpush.msra.mxu0 %v164
    %186 = vmatpush.msra.mxu0 %v163
    %187 = vmatmul.f32.gmra.mxu0 %v169
    %v188 = vpop.f32.mrf.mxu0
    %v189 = vadd.f32 0.0, %v188
    %190 = vdwg.mxu0
    %v191 = vadd.f32 %v167, %v189
    %v192 = vxor.u32 %v191, 2147483648
    %v193 = vmul.f32 %v192, 1.442695
    %v194 = vpow.pop %v193
    %v195 = vadd.f32 %v194, 1.0
    %v196 = vrcp.pop %v195
    %v197 = vmul.f32 %v195, %v196
    %v198 = vsub.f32 1.0, %v197
    %v199 = vmul.f32 %v196, %v198
    %v200 = vadd.f32 %v196, %v199
    %vm201 = vweird.f32 %v195
    %vm202 = vweird.f32 %v196
    %vm203 = vmor %vm201, %vm202
    %v204 = vsel %vm203, %v196, %v200
    %v205 = vand.u32 2147483647, %v195
    %vm206 = vcmp.eq.f32.partialorder %v205, 8.507059e+37
    %v207 = vand.u32 %v195, 2147483648
    %v208 = vor.u32 1.1754944e-38, %v207
    %v209 = vsel %vm206, %v208, %v204
    %v210 = vmul.f32 1.0, %v209
    %v211 = vtanh.pop %v191
    %v212 = vmul.f32 %v210, 0.0
    %214 = vrot.lane.b32.xlu0 %v211, 96
    %v215 = vpop.permute.xlu0 %214
    %v217 = vmul.f32 %v210, %v215
    %219 = vrot.lane.b32.xlu0 %v217, 16
    %v220 = vpop.permute.xlu0 %219
    %v222 = vadd.f32 %v212, %v220
    %v223 = vtanh.pop %v222
    %225 = vrot.lane.b32.xlu0 %v223, 32
    %v226 = vpop.permute.xlu0 %225
    %v228 = vmul.f32 %v210, %v226
    %vm229 = vcmp.gt.s32.totalorder %v162, 0
    %v230 = vsel %vm229, 1, 0
    %231 = vset.pattern.permute.xlu0 0
    %232 = vperm.xlu0 %231, %v230
    %v233 = vpop.permute.xlu0 %232
    %vm234 = vcmp.eq.s32.totalorder %v233, 1
    %v235 = vsel %vm234, %v228, 0.0
    %v236 = vsel %vm234, %v222, 0.0
    %v237 = vld [vmem:[#allocation3 + $0xe] sm:$0x3]
    %238 = vmatpush.msra.mxu0 0.0
    %239 = vmatpush.msra.mxu0 0.0
    %240 = vmatpush.msra.mxu0 0.0
    %241 = vmatpush.msra.mxu0 0.0
    %242 = vmatpush.msra.mxu0 0.0
    %243 = vmatpush.msra.mxu0 0.0
    %244 = vmatpush.msra.mxu0 0.0
    %245 = vmatpush.msra.mxu0 0.0
    %246 = vmatpush.msra.mxu0 0.0
    %247 = vmatpush.msra.mxu0 0.0
    %248 = vmatpush.msra.mxu0 0.0
    %249 = vmatpush.msra.mxu0 0.0
    %250 = vmatpush.msra.mxu0 0.0
    %251 = vmatpush.msra.mxu0 0.0
    %252 = vmatpush.msra.mxu0 %v166
    %253 = vmatpush.msra.mxu0 %v165
    %254 = vmatmul.f32.gmra.mxu0 %v169
    %v255 = vpop.f32.mrf.mxu0
    %v256 = vadd.f32 0.0, %v255
    %257 = vdwg.mxu0
    %v258 = vadd.f32 %v237, %v256
    %v259 = vxor.u32 %v258, 2147483648
    %v260 = vmul.f32 %v259, 1.442695
    %v261 = vpow.pop %v260
    %v262 = vadd.f32 %v261, 1.0
    %v263 = vrcp.pop %v262
    %v264 = vmul.f32 %v262, %v263
    %v265 = vsub.f32 1.0, %v264
    %v266 = vmul.f32 %v263, %v265
    %v267 = vadd.f32 %v263, %v266
    %vm268 = vweird.f32 %v262
    %vm269 = vweird.f32 %v263
    %vm270 = vmor %vm268, %vm269
    %v271 = vsel %vm270, %v263, %v267
    %v272 = vand.u32 2147483647, %v262
    %vm273 = vcmp.eq.f32.partialorder %v272, 8.507059e+37
    %v274 = vand.u32 %v262, 2147483648
    %v275 = vor.u32 1.1754944e-38, %v274
    %v276 = vsel %vm273, %v275, %v271
    %v277 = vmul.f32 1.0, %v276
    %v278 = vtanh.pop %v258
    %v279 = vmul.f32 %v277, 0.0
    %281 = vrot.lane.b32.xlu0 %v278, 96
    %v282 = vpop.permute.xlu0 %281
    %v284 = vmul.f32 %v277, %v282
    %286 = vrot.lane.b32.xlu0 %v284, 16
    %v287 = vpop.permute.xlu0 %286
    %v289 = vadd.f32 %v279, %v287
    %v290 = vtanh.pop %v289
    %292 = vrot.lane.b32.xlu0 %v290, 32
    %v293 = vpop.permute.xlu0 %292
    %v295 = vmul.f32 %v277, %v293
    %vm296 = vcmp.gt.s32.totalorder %v162, 7
    %v297 = vsel %vm296, 1, 0
    %298 = vset.pattern.permute.xlu0 0
    %299 = vperm.xlu0 %298, %v297
    %v300 = vpop.permute.xlu0 %299
    %vm301 = vcmp.eq.s32.totalorder %v300, 1
    %v302 = vsel %vm301, %v295, 0.0
    %v303 = vsel %vm301, %v289, 0.0
    %v304 = vld [vmem:[#allocation2 + $0x2] sm:$0x3]
    %306 = vrot.lane.b32.xlu0 %v235, 80
    %v307 = vpop.permute.xlu0 %306
    %v308 = vsel %vm98, %v307, 0
    %310 = vmatpush.msra.mxu0 0.0
    %311 = vmatpush.msra.mxu0 0.0
    %312 = vmatpush.msra.mxu0 0.0
    %313 = vmatpush.msra.mxu0 0.0
    %314 = vmatpush.msra.mxu0 0.0
    %315 = vmatpush.msra.mxu0 0.0
    %316 = vmatpush.msra.mxu0 0.0
    %317 = vmatpush.msra.mxu0 0.0
    %318 = vmatpush.msra.mxu0 0.0
    %319 = vmatpush.msra.mxu0 0.0
    %320 = vmatpush.msra.mxu0 0.0
    %321 = vmatpush.msra.mxu0 0.0
    %322 = vmatpush.msra.mxu0 0.0
    %323 = vmatpush.msra.mxu0 0.0
    %324 = vmatpush.msra.mxu0 %v164
    %325 = vmatpush.msra.mxu0 %v163
    %326 = vmatmul.f32.gmra.mxu0 %v308
    %v327 = vpop.f32.mrf.mxu0
    %v328 = vadd.f32 0.0, %v327
    %329 = vdwg.mxu0
    %v330 = vadd.f32 %v304, %v328
    %v331 = vxor.u32 %v330, 2147483648
    %v332 = vmul.f32 %v331, 1.442695
    %v333 = vpow.pop %v332
    %v334 = vadd.f32 %v333, 1.0
    %v335 = vrcp.pop %v334
    %v336 = vmul.f32 %v334, %v335
    %v337 = vsub.f32 1.0, %v336
    %v338 = vmul.f32 %v335, %v337
    %v339 = vadd.f32 %v335, %v338
    %vm340 = vweird.f32 %v334
    %vm341 = vweird.f32 %v335
    %vm342 = vmor %vm340, %vm341
    %v343 = vsel %vm342, %v335, %v339
    %v344 = vand.u32 2147483647, %v334
    %vm345 = vcmp.eq.f32.partialorder %v344, 8.507059e+37
    %v346 = vand.u32 %v334, 2147483648
    %v347 = vor.u32 1.1754944e-38, %v346
    %v348 = vsel %vm345, %v347, %v343
    %v349 = vmul.f32 1.0, %v348
    %v350 = vtanh.pop %v330
    %v351 = vmul.f32 %v349, %v236
    %353 = vrot.lane.b32.xlu0 %v350, 96
    %v354 = vpop.permute.xlu0 %353
    %v356 = vmul.f32 %v349, %v354
    %358 = vrot.lane.b32.xlu0 %v356, 16
    %v359 = vpop.permute.xlu0 %358
    %v361 = vadd.f32 %v351, %v359
    %v362 = vtanh.pop %v361
    %364 = vrot.lane.b32.xlu0 %v362, 32
    %v365 = vpop.permute.xlu0 %364
    %v367 = vmul.f32 %v349, %v365
    %vm368 = vcmp.gt.s32.totalorder %v162, 1
    %v369 = vsel %vm368, 1, 0
    %370 = vset.pattern.permute.xlu0 0
    %371 = vperm.xlu0 %370, %v369
    %v372 = vpop.permute.xlu0 %371
    %vm373 = vcmp.eq.s32.totalorder %v372, 1
    %v374 = vsel %vm373, %v367, %v235
    %v375 = vsel %vm373, %v361, %v236
    %v376 = vld [vmem:[#allocation3 + $0xc] sm:$0x3]
    %378 = vrot.lane.b32.xlu0 %v302, 80
    %v379 = vpop.permute.xlu0 %378
    %v380 = vsel %vm98, %v379, 0
    %382 = vmatpush.msra.mxu0 0.0
    %383 = vmatpush.msra.mxu0 0.0
    %384 = vmatpush.msra.mxu0 0.0
    %385 = vmatpush.msra.mxu0 0.0
    %386 = vmatpush.msra.mxu0 0.0
    %387 = vmatpush.msra.mxu0 0.0
    %388 = vmatpush.msra.mxu0 0.0
    %389 = vmatpush.msra.mxu0 0.0
    %390 = vmatpush.msra.mxu0 0.0
    %391 = vmatpush.msra.mxu0 0.0
    %392 = vmatpush.msra.mxu0 0.0
    %393 = vmatpush.msra.mxu0 0.0
    %394 = vmatpush.msra.mxu0 0.0
    %395 = vmatpush.msra.mxu0 0.0
    %396 = vmatpush.msra.mxu0 %v166
    %397 = vmatpush.msra.mxu0 %v165
    %398 = vmatmul.f32.gmra.mxu0 %v380
    %v399 = vpop.f32.mrf.mxu0
    %v400 = vadd.f32 0.0, %v399
    %401 = vdwg.mxu0
    %v402 = vadd.f32 %v376, %v400
    %v403 = vxor.u32 %v402, 2147483648
    %v404 = vmul.f32 %v403, 1.442695
    %v405 = vpow.pop %v404
    %v406 = vadd.f32 %v405, 1.0
    %v407 = vrcp.pop %v406
    %v408 = vmul.f32 %v406, %v407
    %v409 = vsub.f32 1.0, %v408
    %v410 = vmul.f32 %v407, %v409
    %v411 = vadd.f32 %v407, %v410
    %vm412 = vweird.f32 %v406
    %vm413 = vweird.f32 %v407
    %vm414 = vmor %vm412, %vm413
    %v415 = vsel %vm414, %v407, %v411
    %v416 = vand.u32 2147483647, %v406
    %vm417 = vcmp.eq.f32.partialorder %v416, 8.507059e+37
    %v418 = vand.u32 %v406, 2147483648
    %v419 = vor.u32 1.1754944e-38, %v418
    %v420 = vsel %vm417, %v419, %v415
    %v421 = vmul.f32 1.0, %v420
    %v422 = vtanh.pop %v402
    %v423 = vmul.f32 %v421, %v303
    %425 = vrot.lane.b32.xlu0 %v422, 96
    %v426 = vpop.permute.xlu0 %425
    %v428 = vmul.f32 %v421, %v426
    %430 = vrot.lane.b32.xlu0 %v428, 16
    %v431 = vpop.permute.xlu0 %430
    %v433 = vadd.f32 %v423, %v431
    %v434 = vtanh.pop %v433
    %436 = vrot.lane.b32.xlu0 %v434, 32
    %v437 = vpop.permute.xlu0 %436
    %v439 = vmul.f32 %v421, %v437
    %vm440 = vcmp.gt.s32.totalorder %v162, 6
    %v441 = vsel %vm440, 1, 0
    %442 = vset.pattern.permute.xlu0 0
    %443 = vperm.xlu0 %442, %v441
    %v444 = vpop.permute.xlu0 %443
    %vm445 = vcmp.eq.s32.totalorder %v444, 1
    %v446 = vsel %vm445, %v439, %v302
    %v447 = vsel %vm445, %v433, %v303
    %v448 = vld [vmem:[#allocation2 + $0x4] sm:$0x3]
    %450 = vrot.lane.b32.xlu0 %v374, 80
    %v451 = vpop.permute.xlu0 %450
    %v452 = vsel %vm98, %v451, 0
    %454 = vmatpush.msra.mxu0 0.0
    %455 = vmatpush.msra.mxu0 0.0
    %456 = vmatpush.msra.mxu0 0.0
    %457 = vmatpush.msra.mxu0 0.0
    %458 = vmatpush.msra.mxu0 0.0
    %459 = vmatpush.msra.mxu0 0.0
    %460 = vmatpush.msra.mxu0 0.0
    %461 = vmatpush.msra.mxu0 0.0
    %462 = vmatpush.msra.mxu0 0.0
    %463 = vmatpush.msra.mxu0 0.0
    %464 = vmatpush.msra.mxu0 0.0
    %465 = vmatpush.msra.mxu0 0.0
    %466 = vmatpush.msra.mxu0 0.0
    %467 = vmatpush.msra.mxu0 0.0
    %468 = vmatpush.msra.mxu0 %v164
    %469 = vmatpush.msra.mxu0 %v163
    %470 = vmatmul.f32.gmra.mxu0 %v452
    %v471 = vpop.f32.mrf.mxu0
    %v472 = vadd.f32 0.0, %v471
    %473 = vdwg.mxu0
    %v474 = vadd.f32 %v448, %v472
    %v475 = vxor.u32 %v474, 2147483648
    %v476 = vmul.f32 %v475, 1.442695
    %v477 = vpow.pop %v476
    %v478 = vadd.f32 %v477, 1.0
    %v479 = vrcp.pop %v478
    %v480 = vmul.f32 %v478, %v479
    %v481 = vsub.f32 1.0, %v480
    %v482 = vmul.f32 %v479, %v481
    %v483 = vadd.f32 %v479, %v482
    %vm484 = vweird.f32 %v478
    %vm485 = vweird.f32 %v479
    %vm486 = vmor %vm484, %vm485
    %v487 = vsel %vm486, %v479, %v483
    %v488 = vand.u32 2147483647, %v478
    %vm489 = vcmp.eq.f32.partialorder %v488, 8.507059e+37
    %v490 = vand.u32 %v478, 2147483648
    %v491 = vor.u32 1.1754944e-38, %v490
    %v492 = vsel %vm489, %v491, %v487
    %v493 = vmul.f32 1.0, %v492
    %v494 = vtanh.pop %v474
    %v495 = vmul.f32 %v493, %v375
    %497 = vrot.lane.b32.xlu0 %v494, 96
    %v498 = vpop.permute.xlu0 %497
    %v500 = vmul.f32 %v493, %v498
    %502 = vrot.lane.b32.xlu0 %v500, 16
    %v503 = vpop.permute.xlu0 %502
    %v505 = vadd.f32 %v495, %v503
    %v506 = vtanh.pop %v505
    %508 = vrot.lane.b32.xlu0 %v506, 32
    %v509 = vpop.permute.xlu0 %508
    %v511 = vmul.f32 %v493, %v509
    %vm512 = vcmp.gt.s32.totalorder %v162, 2
    %v513 = vsel %vm512, 1, 0
    %514 = vset.pattern.permute.xlu0 0
    %515 = vperm.xlu0 %514, %v513
    %v516 = vpop.permute.xlu0 %515
    %vm517 = vcmp.eq.s32.totalorder %v516, 1
    %v518 = vsel %vm517, %v511, %v374
    %v519 = vsel %vm517, %v505, %v375
    %v520 = vld [vmem:[#allocation3 + $0xa] sm:$0x3]
    %522 = vrot.lane.b32.xlu0 %v446, 80
    %v523 = vpop.permute.xlu0 %522
    %v524 = vsel %vm98, %v523, 0
    %526 = vmatpush.msra.mxu0 0.0
    %527 = vmatpush.msra.mxu0 0.0
    %528 = vmatpush.msra.mxu0 0.0
    %529 = vmatpush.msra.mxu0 0.0
    %530 = vmatpush.msra.mxu0 0.0
    %531 = vmatpush.msra.mxu0 0.0
    %532 = vmatpush.msra.mxu0 0.0
    %533 = vmatpush.msra.mxu0 0.0
    %534 = vmatpush.msra.mxu0 0.0
    %535 = vmatpush.msra.mxu0 0.0
    %536 = vmatpush.msra.mxu0 0.0
    %537 = vmatpush.msra.mxu0 0.0
    %538 = vmatpush.msra.mxu0 0.0
    %539 = vmatpush.msra.mxu0 0.0
    %540 = vmatpush.msra.mxu0 %v166
    %541 = vmatpush.msra.mxu0 %v165
    %542 = vmatmul.f32.gmra.mxu0 %v524
    %v543 = vpop.f32.mrf.mxu0
    %v544 = vadd.f32 0.0, %v543
    %545 = vdwg.mxu0
    %v546 = vadd.f32 %v520, %v544
    %v547 = vxor.u32 %v546, 2147483648
    %v548 = vmul.f32 %v547, 1.442695
    %v549 = vpow.pop %v548
    %v550 = vadd.f32 %v549, 1.0
    %v551 = vrcp.pop %v550
    %v552 = vmul.f32 %v550, %v551
    %v553 = vsub.f32 1.0, %v552
    %v554 = vmul.f32 %v551, %v553
    %v555 = vadd.f32 %v551, %v554
    %vm556 = vweird.f32 %v550
    %vm557 = vweird.f32 %v551
    %vm558 = vmor %vm556, %vm557
    %v559 = vsel %vm558, %v551, %v555
    %v560 = vand.u32 2147483647, %v550
    %vm561 = vcmp.eq.f32.partialorder %v560, 8.507059e+37
    %v562 = vand.u32 %v550, 2147483648
    %v563 = vor.u32 1.1754944e-38, %v562
    %v564 = vsel %vm561, %v563, %v559
    %v565 = vmul.f32 1.0, %v564
    %v566 = vtanh.pop %v546
    %v567 = vmul.f32 %v565, %v447
    %569 = vrot.lane.b32.xlu0 %v566, 96
    %v570 = vpop.permute.xlu0 %569
    %v572 = vmul.f32 %v565, %v570
    %574 = vrot.lane.b32.xlu0 %v572, 16
    %v575 = vpop.permute.xlu0 %574
    %v577 = vadd.f32 %v567, %v575
    %v578 = vtanh.pop %v577
    %580 = vrot.lane.b32.xlu0 %v578, 32
    %v581 = vpop.permute.xlu0 %580
    %v583 = vmul.f32 %v565, %v581
    %vm584 = vcmp.gt.s32.totalorder %v162, 5
    %v585 = vsel %vm584, 1, 0
    %586 = vset.pattern.permute.xlu0 0
    %587 = vperm.xlu0 %586, %v585
    %v588 = vpop.permute.xlu0 %587
    %vm589 = vcmp.eq.s32.totalorder %v588, 1
    %v590 = vsel %vm589, %v583, %v446
    %v591 = vsel %vm589, %v577, %v447
    %v592 = vld [vmem:[#allocation2 + $0x6] sm:$0x3]
    %594 = vrot.lane.b32.xlu0 %v518, 80
    %v595 = vpop.permute.xlu0 %594
    %v596 = vsel %vm98, %v595, 0
    %598 = vmatpush.msra.mxu0 0.0
    %599 = vmatpush.msra.mxu0 0.0
    %600 = vmatpush.msra.mxu0 0.0
    %601 = vmatpush.msra.mxu0 0.0
    %602 = vmatpush.msra.mxu0 0.0
    %603 = vmatpush.msra.mxu0 0.0
    %604 = vmatpush.msra.mxu0 0.0
    %605 = vmatpush.msra.mxu0 0.0
    %606 = vmatpush.msra.mxu0 0.0
    %607 = vmatpush.msra.mxu0 0.0
    %608 = vmatpush.msra.mxu0 0.0
    %609 = vmatpush.msra.mxu0 0.0
    %610 = vmatpush.msra.mxu0 0.0
    %611 = vmatpush.msra.mxu0 0.0
    %612 = vmatpush.msra.mxu0 %v164
    %613 = vmatpush.msra.mxu0 %v163
    %614 = vmatmul.f32.gmra.mxu0 %v596
    %v615 = vpop.f32.mrf.mxu0
    %v616 = vadd.f32 0.0, %v615
    %617 = vdwg.mxu0
    %v618 = vadd.f32 %v592, %v616
    %v619 = vxor.u32 %v618, 2147483648
    %v620 = vmul.f32 %v619, 1.442695
    %v621 = vpow.pop %v620
    %v622 = vadd.f32 %v621, 1.0
    %v623 = vrcp.pop %v622
    %v624 = vmul.f32 %v622, %v623
    %v625 = vsub.f32 1.0, %v624
    %v626 = vmul.f32 %v623, %v625
    %v627 = vadd.f32 %v623, %v626
    %vm628 = vweird.f32 %v622
    %vm629 = vweird.f32 %v623
    %vm630 = vmor %vm628, %vm629
    %v631 = vsel %vm630, %v623, %v627
    %v632 = vand.u32 2147483647, %v622
    %vm633 = vcmp.eq.f32.partialorder %v632, 8.507059e+37
    %v634 = vand.u32 %v622, 2147483648
    %v635 = vor.u32 1.1754944e-38, %v634
    %v636 = vsel %vm633, %v635, %v631
    %v637 = vmul.f32 1.0, %v636
    %v638 = vtanh.pop %v618
    %v639 = vmul.f32 %v637, %v519
    %641 = vrot.lane.b32.xlu0 %v638, 96
    %v642 = vpop.permute.xlu0 %641
    %v644 = vmul.f32 %v637, %v642
    %646 = vrot.lane.b32.xlu0 %v644, 16
    %v647 = vpop.permute.xlu0 %646
    %v649 = vadd.f32 %v639, %v647
    %v650 = vtanh.pop %v649
    %652 = vrot.lane.b32.xlu0 %v650, 32
    %v653 = vpop.permute.xlu0 %652
    %v655 = vmul.f32 %v637, %v653
    %vm656 = vcmp.gt.s32.totalorder %v162, 3
    %v657 = vsel %vm656, 1, 0
    %658 = vset.pattern.permute.xlu0 0
    %659 = vperm.xlu0 %658, %v657
    %v660 = vpop.permute.xlu0 %659
    %vm661 = vcmp.eq.s32.totalorder %v660, 1
    %v662 = vsel %vm661, %v655, %v518
    %v663 = vsel %vm661, %v649, %v519
    %v664 = vld [vmem:[#allocation3 + $0x8] sm:$0x3]
    %666 = vrot.lane.b32.xlu0 %v590, 80
    %v667 = vpop.permute.xlu0 %666
    %v668 = vsel %vm98, %v667, 0
    %670 = vmatpush.msra.mxu0 0.0
    %671 = vmatpush.msra.mxu0 0.0
    %672 = vmatpush.msra.mxu0 0.0
    %673 = vmatpush.msra.mxu0 0.0
    %674 = vmatpush.msra.mxu0 0.0
    %675 = vmatpush.msra.mxu0 0.0
    %676 = vmatpush.msra.mxu0 0.0
    %677 = vmatpush.msra.mxu0 0.0
    %678 = vmatpush.msra.mxu0 0.0
    %679 = vmatpush.msra.mxu0 0.0
    %680 = vmatpush.msra.mxu0 0.0
    %681 = vmatpush.msra.mxu0 0.0
    %682 = vmatpush.msra.mxu0 0.0
    %683 = vmatpush.msra.mxu0 0.0
    %684 = vmatpush.msra.mxu0 %v166
    %685 = vmatpush.msra.mxu0 %v165
    %686 = vmatmul.f32.gmra.mxu0 %v668
    %v687 = vpop.f32.mrf.mxu0
    %v688 = vadd.f32 0.0, %v687
    %689 = vdwg.mxu0
    %v690 = vadd.f32 %v664, %v688
    %v691 = vxor.u32 %v690, 2147483648
    %v692 = vmul.f32 %v691, 1.442695
    %v693 = vpow.pop %v692
    %v694 = vadd.f32 %v693, 1.0
    %v695 = vrcp.pop %v694
    %v696 = vmul.f32 %v694, %v695
    %v697 = vsub.f32 1.0, %v696
    %v698 = vmul.f32 %v695, %v697
    %v699 = vadd.f32 %v695, %v698
    %vm700 = vweird.f32 %v694
    %vm701 = vweird.f32 %v695
    %vm702 = vmor %vm700, %vm701
    %v703 = vsel %vm702, %v695, %v699
    %v704 = vand.u32 2147483647, %v694
    %vm705 = vcmp.eq.f32.partialorder %v704, 8.507059e+37
    %v706 = vand.u32 %v694, 2147483648
    %v707 = vor.u32 1.1754944e-38, %v706
    %v708 = vsel %vm705, %v707, %v703
    %v709 = vmul.f32 1.0, %v708
    %v710 = vtanh.pop %v690
    %v711 = vmul.f32 %v709, %v591
    %713 = vrot.lane.b32.xlu0 %v710, 96
    %v714 = vpop.permute.xlu0 %713
    %v716 = vmul.f32 %v709, %v714
    %718 = vrot.lane.b32.xlu0 %v716, 16
    %v719 = vpop.permute.xlu0 %718
    %v721 = vadd.f32 %v711, %v719
    %v722 = vtanh.pop %v721
    %724 = vrot.lane.b32.xlu0 %v722, 32
    %v725 = vpop.permute.xlu0 %724
    %v727 = vmul.f32 %v709, %v725
    %vm728 = vcmp.gt.s32.totalorder %v162, 4
    %v729 = vsel %vm728, 1, 0
    %730 = vset.pattern.permute.xlu0 0
    %731 = vperm.xlu0 %730, %v729
    %v732 = vpop.permute.xlu0 %731
    %vm733 = vcmp.eq.s32.totalorder %v732, 1
    %v734 = vsel %vm733, %v727, %v590
    %v735 = vsel %vm733, %v721, %v591
    %v736 = vld [vmem:[#allocation2 + $0x8] sm:$0x3]
    %738 = vrot.lane.b32.xlu0 %v662, 80
    %v739 = vpop.permute.xlu0 %738
    %v740 = vsel %vm98, %v739, 0
    %742 = vmatpush.msra.mxu0 0.0
    %743 = vmatpush.msra.mxu0 0.0
    %744 = vmatpush.msra.mxu0 0.0
    %745 = vmatpush.msra.mxu0 0.0
    %746 = vmatpush.msra.mxu0 0.0
    %747 = vmatpush.msra.mxu0 0.0
    %748 = vmatpush.msra.mxu0 0.0
    %749 = vmatpush.msra.mxu0 0.0
    %750 = vmatpush.msra.mxu0 0.0
    %751 = vmatpush.msra.mxu0 0.0
    %752 = vmatpush.msra.mxu0 0.0
    %753 = vmatpush.msra.mxu0 0.0
    %754 = vmatpush.msra.mxu0 0.0
    %755 = vmatpush.msra.mxu0 0.0
    %756 = vmatpush.msra.mxu0 %v164
    %757 = vmatpush.msra.mxu0 %v163
    %758 = vmatmul.f32.gmra.mxu0 %v740
    %v759 = vpop.f32.mrf.mxu0
    %v760 = vadd.f32 0.0, %v759
    %761 = vdwg.mxu0
    %v762 = vadd.f32 %v736, %v760
    %v763 = vxor.u32 %v762, 2147483648
    %v764 = vmul.f32 %v763, 1.442695
    %v765 = vpow.pop %v764
    %v766 = vadd.f32 %v765, 1.0
    %v767 = vrcp.pop %v766
    %v768 = vmul.f32 %v766, %v767
    %v769 = vsub.f32 1.0, %v768
    %v770 = vmul.f32 %v767, %v769
    %v771 = vadd.f32 %v767, %v770
    %vm772 = vweird.f32 %v766
    %vm773 = vweird.f32 %v767
    %vm774 = vmor %vm772, %vm773
    %v775 = vsel %vm774, %v767, %v771
    %v776 = vand.u32 2147483647, %v766
    %vm777 = vcmp.eq.f32.partialorder %v776, 8.507059e+37
    %v778 = vand.u32 %v766, 2147483648
    %v779 = vor.u32 1.1754944e-38, %v778
    %v780 = vsel %vm777, %v779, %v775
    %v781 = vmul.f32 1.0, %v780
    %v782 = vtanh.pop %v762
    %v783 = vmul.f32 %v781, %v663
    %785 = vrot.lane.b32.xlu0 %v782, 96
    %v786 = vpop.permute.xlu0 %785
    %v788 = vmul.f32 %v781, %v786
    %790 = vrot.lane.b32.xlu0 %v788, 16
    %v791 = vpop.permute.xlu0 %790
    %v793 = vadd.f32 %v783, %v791
    %v794 = vtanh.pop %v793
    %796 = vrot.lane.b32.xlu0 %v794, 32
    %v797 = vpop.permute.xlu0 %796
    %v799 = vmul.f32 %v781, %v797
    %v800 = vsel %vm733, %v799, %v662
    %v801 = vsel %vm733, %v793, %v663
    %v802 = vld [vmem:[#allocation3 + $0x6] sm:$0x3]
    %804 = vrot.lane.b32.xlu0 %v734, 80
    %v805 = vpop.permute.xlu0 %804
    %v806 = vsel %vm98, %v805, 0
    %808 = vmatpush.msra.mxu0 0.0
    %809 = vmatpush.msra.mxu0 0.0
    %810 = vmatpush.msra.mxu0 0.0
    %811 = vmatpush.msra.mxu0 0.0
    %812 = vmatpush.msra.mxu0 0.0
    %813 = vmatpush.msra.mxu0 0.0
    %814 = vmatpush.msra.mxu0 0.0
    %815 = vmatpush.msra.mxu0 0.0
    %816 = vmatpush.msra.mxu0 0.0
    %817 = vmatpush.msra.mxu0 0.0
    %818 = vmatpush.msra.mxu0 0.0
    %819 = vmatpush.msra.mxu0 0.0
    %820 = vmatpush.msra.mxu0 0.0
    %821 = vmatpush.msra.mxu0 0.0
    %822 = vmatpush.msra.mxu0 %v166
    %823 = vmatpush.msra.mxu0 %v165
    %824 = vmatmul.f32.gmra.mxu0 %v806
    %v825 = vpop.f32.mrf.mxu0
    %v826 = vadd.f32 0.0, %v825
    %827 = vdwg.mxu0
    %v828 = vadd.f32 %v802, %v826
    %v829 = vxor.u32 %v828, 2147483648
    %v830 = vmul.f32 %v829, 1.442695
    %v831 = vpow.pop %v830
    %v832 = vadd.f32 %v831, 1.0
    %v833 = vrcp.pop %v832
    %v834 = vmul.f32 %v832, %v833
    %v835 = vsub.f32 1.0, %v834
    %v836 = vmul.f32 %v833, %v835
    %v837 = vadd.f32 %v833, %v836
    %vm838 = vweird.f32 %v832
    %vm839 = vweird.f32 %v833
    %vm840 = vmor %vm838, %vm839
    %v841 = vsel %vm840, %v833, %v837
    %v842 = vand.u32 2147483647, %v832
    %vm843 = vcmp.eq.f32.partialorder %v842, 8.507059e+37
    %v844 = vand.u32 %v832, 2147483648
    %v845 = vor.u32 1.1754944e-38, %v844
    %v846 = vsel %vm843, %v845, %v841
    %v847 = vmul.f32 1.0, %v846
    %v848 = vtanh.pop %v828
    %v849 = vmul.f32 %v847, %v735
    %851 = vrot.lane.b32.xlu0 %v848, 96
    %v852 = vpop.permute.xlu0 %851
    %v854 = vmul.f32 %v847, %v852
    %856 = vrot.lane.b32.xlu0 %v854, 16
    %v857 = vpop.permute.xlu0 %856
    %v859 = vadd.f32 %v849, %v857
    %v860 = vtanh.pop %v859
    %862 = vrot.lane.b32.xlu0 %v860, 32
    %v863 = vpop.permute.xlu0 %862
    %v865 = vmul.f32 %v847, %v863
    %v866 = vsel %vm661, %v865, %v734
    %v867 = vsel %vm661, %v859, %v735
    %v868 = vld [vmem:[#allocation2 + $0xa] sm:$0x3]
    %870 = vrot.lane.b32.xlu0 %v800, 80
    %v871 = vpop.permute.xlu0 %870
    %v872 = vsel %vm98, %v871, 0
    %874 = vmatpush.msra.mxu0 0.0
    %875 = vmatpush.msra.mxu0 0.0
    %876 = vmatpush.msra.mxu0 0.0
    %877 = vmatpush.msra.mxu0 0.0
    %878 = vmatpush.msra.mxu0 0.0
    %879 = vmatpush.msra.mxu0 0.0
    %880 = vmatpush.msra.mxu0 0.0
    %881 = vmatpush.msra.mxu0 0.0
    %882 = vmatpush.msra.mxu0 0.0
    %883 = vmatpush.msra.mxu0 0.0
    %884 = vmatpush.msra.mxu0 0.0
    %885 = vmatpush.msra.mxu0 0.0
    %886 = vmatpush.msra.mxu0 0.0
    %887 = vmatpush.msra.mxu0 0.0
    %888 = vmatpush.msra.mxu0 %v164
    %889 = vmatpush.msra.mxu0 %v163
    %890 = vmatmul.f32.gmra.mxu0 %v872
    %v891 = vpop.f32.mrf.mxu0
    %v892 = vadd.f32 0.0, %v891
    %893 = vdwg.mxu0
    %v894 = vadd.f32 %v868, %v892
    %v895 = vxor.u32 %v894, 2147483648
    %v896 = vmul.f32 %v895, 1.442695
    %v897 = vpow.pop %v896
    %v898 = vadd.f32 %v897, 1.0
    %v899 = vrcp.pop %v898
    %v900 = vmul.f32 %v898, %v899
    %v901 = vsub.f32 1.0, %v900
    %v902 = vmul.f32 %v899, %v901
    %v903 = vadd.f32 %v899, %v902
    %vm904 = vweird.f32 %v898
    %vm905 = vweird.f32 %v899
    %vm906 = vmor %vm904, %vm905
    %v907 = vsel %vm906, %v899, %v903
    %v908 = vand.u32 2147483647, %v898
    %vm909 = vcmp.eq.f32.partialorder %v908, 8.507059e+37
    %v910 = vand.u32 %v898, 2147483648
    %v911 = vor.u32 1.1754944e-38, %v910
    %v912 = vsel %vm909, %v911, %v907
    %v913 = vmul.f32 1.0, %v912
    %v914 = vtanh.pop %v894
    %v915 = vmul.f32 %v913, %v801
    %917 = vrot.lane.b32.xlu0 %v914, 96
    %v918 = vpop.permute.xlu0 %917
    %v920 = vmul.f32 %v913, %v918
    %922 = vrot.lane.b32.xlu0 %v920, 16
    %v923 = vpop.permute.xlu0 %922
    %v925 = vadd.f32 %v915, %v923
    %v926 = vtanh.pop %v925
    %928 = vrot.lane.b32.xlu0 %v926, 32
    %v929 = vpop.permute.xlu0 %928
    %v931 = vmul.f32 %v913, %v929
    %v932 = vsel %vm589, %v931, %v800
    %v933 = vsel %vm589, %v925, %v801
    %v934 = vld [vmem:[#allocation3 + $0x4] sm:$0x3]
    %936 = vrot.lane.b32.xlu0 %v866, 80
    %v937 = vpop.permute.xlu0 %936
    %v938 = vsel %vm98, %v937, 0
    %940 = vmatpush.msra.mxu0 0.0
    %941 = vmatpush.msra.mxu0 0.0
    %942 = vmatpush.msra.mxu0 0.0
    %943 = vmatpush.msra.mxu0 0.0
    %944 = vmatpush.msra.mxu0 0.0
    %945 = vmatpush.msra.mxu0 0.0
    %946 = vmatpush.msra.mxu0 0.0
    %947 = vmatpush.msra.mxu0 0.0
    %948 = vmatpush.msra.mxu0 0.0
    %949 = vmatpush.msra.mxu0 0.0
    %950 = vmatpush.msra.mxu0 0.0
    %951 = vmatpush.msra.mxu0 0.0
    %952 = vmatpush.msra.mxu0 0.0
    %953 = vmatpush.msra.mxu0 0.0
    %954 = vmatpush.msra.mxu0 %v166
    %955 = vmatpush.msra.mxu0 %v165
    %956 = vmatmul.f32.gmra.mxu0 %v938
    %v957 = vpop.f32.mrf.mxu0
    %v958 = vadd.f32 0.0, %v957
    %959 = vdwg.mxu0
    %v960 = vadd.f32 %v934, %v958
    %v961 = vxor.u32 %v960, 2147483648
    %v962 = vmul.f32 %v961, 1.442695
    %v963 = vpow.pop %v962
    %v964 = vadd.f32 %v963, 1.0
    %v965 = vrcp.pop %v964
    %v966 = vmul.f32 %v964, %v965
    %v967 = vsub.f32 1.0, %v966
    %v968 = vmul.f32 %v965, %v967
    %v969 = vadd.f32 %v965, %v968
    %vm970 = vweird.f32 %v964
    %vm971 = vweird.f32 %v965
    %vm972 = vmor %vm970, %vm971
    %v973 = vsel %vm972, %v965, %v969
    %v974 = vand.u32 2147483647, %v964
    %vm975 = vcmp.eq.f32.partialorder %v974, 8.507059e+37
    %v976 = vand.u32 %v964, 2147483648
    %v977 = vor.u32 1.1754944e-38, %v976
    %v978 = vsel %vm975, %v977, %v973
    %v979 = vmul.f32 1.0, %v978
    %v980 = vtanh.pop %v960
    %v981 = vmul.f32 %v979, %v867
    %983 = vrot.lane.b32.xlu0 %v980, 96
    %v984 = vpop.permute.xlu0 %983
    %v986 = vmul.f32 %v979, %v984
    %988 = vrot.lane.b32.xlu0 %v986, 16
    %v989 = vpop.permute.xlu0 %988
    %v991 = vadd.f32 %v981, %v989
    %v992 = vtanh.pop %v991
    %994 = vrot.lane.b32.xlu0 %v992, 32
    %v995 = vpop.permute.xlu0 %994
    %v997 = vmul.f32 %v979, %v995
    %v998 = vsel %vm517, %v997, %v866
    %v999 = vsel %vm517, %v991, %v867
    %v1000 = vld [vmem:[#allocation2 + $0xc] sm:$0x3]
    %1002 = vrot.lane.b32.xlu0 %v932, 80
    %v1003 = vpop.permute.xlu0 %1002
    %v1004 = vsel %vm98, %v1003, 0
    %1006 = vmatpush.msra.mxu0 0.0
    %1007 = vmatpush.msra.mxu0 0.0
    %1008 = vmatpush.msra.mxu0 0.0
    %1009 = vmatpush.msra.mxu0 0.0
    %1010 = vmatpush.msra.mxu0 0.0
    %1011 = vmatpush.msra.mxu0 0.0
    %1012 = vmatpush.msra.mxu0 0.0
    %1013 = vmatpush.msra.mxu0 0.0
    %1014 = vmatpush.msra.mxu0 0.0
    %1015 = vmatpush.msra.mxu0 0.0
    %1016 = vmatpush.msra.mxu0 0.0
    %1017 = vmatpush.msra.mxu0 0.0
    %1018 = vmatpush.msra.mxu0 0.0
    %1019 = vmatpush.msra.mxu0 0.0
    %1020 = vmatpush.msra.mxu0 %v164
    %1021 = vmatpush.msra.mxu0 %v163
    %1022 = vmatmul.f32.gmra.mxu0 %v1004
    %v1023 = vpop.f32.mrf.mxu0
    %v1024 = vadd.f32 0.0, %v1023
    %1025 = vdwg.mxu0
    %v1026 = vadd.f32 %v1000, %v1024
    %v1027 = vxor.u32 %v1026, 2147483648
    %v1028 = vmul.f32 %v1027, 1.442695
    %v1029 = vpow.pop %v1028
    %v1030 = vadd.f32 %v1029, 1.0
    %v1031 = vrcp.pop %v1030
    %v1032 = vmul.f32 %v1030, %v1031
    %v1033 = vsub.f32 1.0, %v1032
    %v1034 = vmul.f32 %v1031, %v1033
    %v1035 = vadd.f32 %v1031, %v1034
    %vm1036 = vweird.f32 %v1030
    %vm1037 = vweird.f32 %v1031
    %vm1038 = vmor %vm1036, %vm1037
    %v1039 = vsel %vm1038, %v1031, %v1035
    %v1040 = vand.u32 2147483647, %v1030
    %vm1041 = vcmp.eq.f32.partialorder %v1040, 8.507059e+37
    %v1042 = vand.u32 %v1030, 2147483648
    %v1043 = vor.u32 1.1754944e-38, %v1042
    %v1044 = vsel %vm1041, %v1043, %v1039
    %v1045 = vmul.f32 1.0, %v1044
    %v1046 = vtanh.pop %v1026
    %v1047 = vmul.f32 %v1045, %v933
    %1049 = vrot.lane.b32.xlu0 %v1046, 96
    %v1050 = vpop.permute.xlu0 %1049
    %v1052 = vmul.f32 %v1045, %v1050
    %1054 = vrot.lane.b32.xlu0 %v1052, 16
    %v1055 = vpop.permute.xlu0 %1054
    %v1057 = vadd.f32 %v1047, %v1055
    %v1058 = vtanh.pop %v1057
    %1060 = vrot.lane.b32.xlu0 %v1058, 32
    %v1061 = vpop.permute.xlu0 %1060
    %v1063 = vmul.f32 %v1045, %v1061
    %v1064 = vsel %vm445, %v1063, %v932
    %v1065 = vsel %vm445, %v1057, %v933
    %v1066 = vld [vmem:[#allocation3 + $0x2] sm:$0x3]
    %1068 = vrot.lane.b32.xlu0 %v998, 80
    %v1069 = vpop.permute.xlu0 %1068
    %v1070 = vsel %vm98, %v1069, 0
    %1072 = vmatpush.msra.mxu0 0.0
    %1073 = vmatpush.msra.mxu0 0.0
    %1074 = vmatpush.msra.mxu0 0.0
    %1075 = vmatpush.msra.mxu0 0.0
    %1076 = vmatpush.msra.mxu0 0.0
    %1077 = vmatpush.msra.mxu0 0.0
    %1078 = vmatpush.msra.mxu0 0.0
    %1079 = vmatpush.msra.mxu0 0.0
    %1080 = vmatpush.msra.mxu0 0.0
    %1081 = vmatpush.msra.mxu0 0.0
    %1082 = vmatpush.msra.mxu0 0.0
    %1083 = vmatpush.msra.mxu0 0.0
    %1084 = vmatpush.msra.mxu0 0.0
    %1085 = vmatpush.msra.mxu0 0.0
    %1086 = vmatpush.msra.mxu0 %v166
    %1087 = vmatpush.msra.mxu0 %v165
    %1088 = vmatmul.f32.gmra.mxu0 %v1070
    %v1089 = vpop.f32.mrf.mxu0
    %v1090 = vadd.f32 0.0, %v1089
    %1091 = vdwg.mxu0
    %v1092 = vadd.f32 %v1066, %v1090
    %v1093 = vxor.u32 %v1092, 2147483648
    %v1094 = vmul.f32 %v1093, 1.442695
    %v1095 = vpow.pop %v1094
    %v1096 = vadd.f32 %v1095, 1.0
    %v1097 = vrcp.pop %v1096
    %v1098 = vmul.f32 %v1096, %v1097
    %v1099 = vsub.f32 1.0, %v1098
    %v1100 = vmul.f32 %v1097, %v1099
    %v1101 = vadd.f32 %v1097, %v1100
    %vm1102 = vweird.f32 %v1096
    %vm1103 = vweird.f32 %v1097
    %vm1104 = vmor %vm1102, %vm1103
    %v1105 = vsel %vm1104, %v1097, %v1101
    %v1106 = vand.u32 2147483647, %v1096
    %vm1107 = vcmp.eq.f32.partialorder %v1106, 8.507059e+37
    %v1108 = vand.u32 %v1096, 2147483648
    %v1109 = vor.u32 1.1754944e-38, %v1108
    %v1110 = vsel %vm1107, %v1109, %v1105
    %v1111 = vmul.f32 1.0, %v1110
    %v1112 = vtanh.pop %v1092
    %v1113 = vmul.f32 %v1111, %v999
    %1115 = vrot.lane.b32.xlu0 %v1112, 96
    %v1116 = vpop.permute.xlu0 %1115
    %v1118 = vmul.f32 %v1111, %v1116
    %1120 = vrot.lane.b32.xlu0 %v1118, 16
    %v1121 = vpop.permute.xlu0 %1120
    %v1123 = vadd.f32 %v1113, %v1121
    %v1124 = vtanh.pop %v1123
    %1126 = vrot.lane.b32.xlu0 %v1124, 32
    %v1127 = vpop.permute.xlu0 %1126
    %v1129 = vmul.f32 %v1111, %v1127
    %v1130 = vsel %vm373, %v1129, %v998
    %v1131 = vsel %vm373, %v1123, %v999
    %v1132 = vld [vmem:[#allocation2 + $0xe] sm:$0x3]
    %1134 = vrot.lane.b32.xlu0 %v1064, 80
    %v1135 = vpop.permute.xlu0 %1134
    %v1136 = vsel %vm98, %v1135, 0
    %1138 = vmatpush.msra.mxu0 0.0
    %1139 = vmatpush.msra.mxu0 0.0
    %1140 = vmatpush.msra.mxu0 0.0
    %1141 = vmatpush.msra.mxu0 0.0
    %1142 = vmatpush.msra.mxu0 0.0
    %1143 = vmatpush.msra.mxu0 0.0
    %1144 = vmatpush.msra.mxu0 0.0
    %1145 = vmatpush.msra.mxu0 0.0
    %1146 = vmatpush.msra.mxu0 0.0
    %1147 = vmatpush.msra.mxu0 0.0
    %1148 = vmatpush.msra.mxu0 0.0
    %1149 = vmatpush.msra.mxu0 0.0
    %1150 = vmatpush.msra.mxu0 0.0
    %1151 = vmatpush.msra.mxu0 0.0
    %1152 = vmatpush.msra.mxu0 %v164
    %1153 = vmatpush.msra.mxu0 %v163
    %1154 = vmatmul.f32.gmra.mxu0 %v1136
    %v1155 = vpop.f32.mrf.mxu0
    %v1156 = vadd.f32 0.0, %v1155
    %1157 = vdwg.mxu0
    %v1158 = vadd.f32 %v1132, %v1156
    %v1159 = vxor.u32 %v1158, 2147483648
    %v1160 = vmul.f32 %v1159, 1.442695
    %v1161 = vpow.pop %v1160
    %v1162 = vadd.f32 %v1161, 1.0
    %v1163 = vrcp.pop %v1162
    %v1164 = vmul.f32 %v1162, %v1163
    %v1165 = vsub.f32 1.0, %v1164
    %v1166 = vmul.f32 %v1163, %v1165
    %v1167 = vadd.f32 %v1163, %v1166
    %vm1168 = vweird.f32 %v1162
    %vm1169 = vweird.f32 %v1163
    %vm1170 = vmor %vm1168, %vm1169
    %v1171 = vsel %vm1170, %v1163, %v1167
    %v1172 = vand.u32 2147483647, %v1162
    %vm1173 = vcmp.eq.f32.partialorder %v1172, 8.507059e+37
    %v1174 = vand.u32 %v1162, 2147483648
    %v1175 = vor.u32 1.1754944e-38, %v1174
    %v1176 = vsel %vm1173, %v1175, %v1171
    %v1177 = vmul.f32 1.0, %v1176
    %v1178 = vtanh.pop %v1158
    %v1179 = vmul.f32 %v1177, %v1065
    %1181 = vrot.lane.b32.xlu0 %v1178, 96
    %v1182 = vpop.permute.xlu0 %1181
    %v1184 = vmul.f32 %v1177, %v1182
    %1186 = vrot.lane.b32.xlu0 %v1184, 16
    %v1187 = vpop.permute.xlu0 %1186
    %v1189 = vadd.f32 %v1179, %v1187
    %v1190 = vtanh.pop %v1189
    %1192 = vrot.lane.b32.xlu0 %v1190, 32
    %v1193 = vpop.permute.xlu0 %1192
    %v1195 = vmul.f32 %v1177, %v1193
    %v1196 = vsel %vm301, %v1195, %v1064
    %v1197 = vld [vmem:[#allocation3] sm:$0x3]
    %1199 = vrot.lane.b32.xlu0 %v1130, 80
    %v1200 = vpop.permute.xlu0 %1199
    %v1201 = vsel %vm98, %v1200, 0
    %1203 = vmatpush.msra.mxu0 0.0
    %1204 = vmatpush.msra.mxu0 0.0
    %1205 = vmatpush.msra.mxu0 0.0
    %1206 = vmatpush.msra.mxu0 0.0
    %1207 = vmatpush.msra.mxu0 0.0
    %1208 = vmatpush.msra.mxu0 0.0
    %1209 = vmatpush.msra.mxu0 0.0
    %1210 = vmatpush.msra.mxu0 0.0
    %1211 = vmatpush.msra.mxu0 0.0
    %1212 = vmatpush.msra.mxu0 0.0
    %1213 = vmatpush.msra.mxu0 0.0
    %1214 = vmatpush.msra.mxu0 0.0
    %1215 = vmatpush.msra.mxu0 0.0
    %1216 = vmatpush.msra.mxu0 0.0
    %1217 = vmatpush.msra.mxu0 %v166
    %1218 = vmatpush.msra.mxu0 %v165
    %1219 = vmatmul.f32.gmra.mxu0 %v1201
    %v1220 = vpop.f32.mrf.mxu0
    %v1221 = vadd.f32 0.0, %v1220
    %1222 = vdwg.mxu0
    %v1223 = vadd.f32 %v1197, %v1221
    %v1224 = vxor.u32 %v1223, 2147483648
    %v1225 = vmul.f32 %v1224, 1.442695
    %v1226 = vpow.pop %v1225
    %v1227 = vadd.f32 %v1226, 1.0
    %v1228 = vrcp.pop %v1227
    %v1229 = vmul.f32 %v1227, %v1228
    %v1230 = vsub.f32 1.0, %v1229
    %v1231 = vmul.f32 %v1228, %v1230
    %v1232 = vadd.f32 %v1228, %v1231
    %vm1233 = vweird.f32 %v1227
    %vm1234 = vweird.f32 %v1228
    %vm1235 = vmor %vm1233, %vm1234
    %v1236 = vsel %vm1235, %v1228, %v1232
    %v1237 = vand.u32 2147483647, %v1227
    %vm1238 = vcmp.eq.f32.partialorder %v1237, 8.507059e+37
    %v1239 = vand.u32 %v1227, 2147483648
    %v1240 = vor.u32 1.1754944e-38, %v1239
    %v1241 = vsel %vm1238, %v1240, %v1236
    %v1242 = vmul.f32 1.0, %v1241
    %v1243 = vtanh.pop %v1223
    %v1244 = vmul.f32 %v1242, %v1131
    %1246 = vrot.lane.b32.xlu0 %v1243, 96
    %v1247 = vpop.permute.xlu0 %1246
    %v1249 = vmul.f32 %v1242, %v1247
    %1251 = vrot.lane.b32.xlu0 %v1249, 16
    %v1252 = vpop.permute.xlu0 %1251
    %v1254 = vadd.f32 %v1244, %v1252
    %v1255 = vtanh.pop %v1254
    %1257 = vrot.lane.b32.xlu0 %v1255, 32
    %v1258 = vpop.permute.xlu0 %1257
    %v1260 = vmul.f32 %v1242, %v1258
    %v1261 = vsel %vm234, %v1260, %v1130
    %v1262 = vld [vmem:[%s9] sm:$0xff]
    %v1263 = vld [vmem:[%s9 + $0x8] sm:$0xff]
    %v1264 = vld [vmem:[%s10] sm:$0xff]
    %v1265 = vld [vmem:[%s10 + $0x8] sm:$0xff]
    %1267 = vrot.lane.b32.xlu0 %v1261, 80
    %v1268 = vpop.permute.xlu0 %1267
    %v1269 = vsel %vm98, %v1268, 0
    %1271 = vmatpush.msra.mxu0 0.0
    %1272 = vmatpush.msra.mxu0 0.0
    %1273 = vmatpush.msra.mxu0 0.0
    %1274 = vmatpush.msra.mxu0 0.0
    %1275 = vmatpush.msra.mxu0 0.0
    %1276 = vmatpush.msra.mxu0 0.0
    %1277 = vmatpush.msra.mxu0 0.0
    %1278 = vmatpush.msra.mxu0 0.0
    %1279 = vmatpush.msra.mxu0 0.0
    %1280 = vmatpush.msra.mxu0 0.0
    %1281 = vmatpush.msra.mxu0 0.0
    %1282 = vmatpush.msra.mxu0 0.0
    %1283 = vmatpush.msra.mxu0 0.0
    %1284 = vmatpush.msra.mxu0 0.0
    %1285 = vmatpush.msra.mxu0 %v1265
    %1286 = vmatpush.msra.mxu0 %v1264
    %1287 = vmatmul.f32.gmra.mxu0 %v1269
    %v1288 = vpop.f32.mrf.mxu0
    %v1289 = vadd.f32 0.0, %v1288
    %1290 = vdwg.mxu0
    %1292 = vrot.lane.b32.xlu0 %v1196, 80
    %v1293 = vpop.permute.xlu0 %1292
    %v1294 = vsel %vm98, %v1293, 0
    %1296 = vmatpush.msra.mxu0 0.0
    %1297 = vmatpush.msra.mxu0 0.0
    %1298 = vmatpush.msra.mxu0 0.0
    %1299 = vmatpush.msra.mxu0 0.0
    %1300 = vmatpush.msra.mxu0 0.0
    %1301 = vmatpush.msra.mxu0 0.0
    %1302 = vmatpush.msra.mxu0 0.0
    %1303 = vmatpush.msra.mxu0 0.0
    %1304 = vmatpush.msra.mxu0 0.0
    %1305 = vmatpush.msra.mxu0 0.0
    %1306 = vmatpush.msra.mxu0 0.0
    %1307 = vmatpush.msra.mxu0 0.0
    %1308 = vmatpush.msra.mxu0 0.0
    %1309 = vmatpush.msra.mxu0 0.0
    %1310 = vmatpush.msra.mxu0 %v1263
    %1311 = vmatpush.msra.mxu0 %v1262
    %1312 = vmatmul.f32.gmra.mxu0 %v1294
    %v1313 = vpop.f32.mrf.mxu0
    %v1314 = vadd.f32 %v1289, %v1313
    %1315 = vdwg.mxu0
    %v1316 = vld [vmem:[%s11] sm:$0x1]
    %v1318 = vperm.slane %v1316, 0
    %v1320 = vadd.f32 %v1314, %v1318
    %vm1321 = vcmask 9216
    %1322 = vst.msk [vmem:[#allocation4] sm:$0x3] %vm1321, %v1320
    // Predicated region
    $region50: #{tpu_custom_call.1} parent=1 // pred_check
      _
    $region51: #{tpu_custom_call.1} parent=1 // pred_check_branch
      %1324 = sbr.rel (0) target = $region53
    $region52: #{tpu_custom_call.1} parent=1 // pred_region
      %1326 = vsyncadd [#allocation5], 0
      %s1328 = sshll.u32 [#allocation4], 4
      %s1329 = int_to_ptr.vmem [resolvable:$true] %s1328
      %s1330 = sshll.u32 %s12, 4
      %s1331 = int_to_ptr.hbm [resolvable:$true] %s1330
      %1333 = dma.vmem_to_hbm [thread:$0]  %s1329, 32, %s1331, [#allocation5]
    $region53: #{tpu_custom_call.1} parent=1 // pred_fallthru
      _
    // Predicated region
    $region54: #{tpu_custom_call.1} parent=1 // pred_check
      _
    $region55: #{tpu_custom_call.1} parent=1 // pred_check_branch
      %1335 = sbr.rel (0) target = $region57
    $region56: #{tpu_custom_call.1} parent=1 // pred_region
      %1337 = dma.done [#allocation5], 32
    $region57: #{tpu_custom_call.1} parent=1 // pred_fallthru
      _
    %1338 = vsyncpa [#allocation5], 1

</llo_original>
